<compile_context>
chip_gen: v6e
topology: v6e:2x2x1
jax: 0.10.0
libtpu: 0.0.40
codegen_flags: <defaults>
</compile_context>

<pallas_src>
import numpy as np

import jax
import jax.numpy as jnp
from jax.experimental import pallas as pl
from jax.experimental.pallas import tpu as pltpu


def _leaky_relu(x, alpha=0.2):
    return jnp.where(x >= 0, x, alpha * x)


# ----------------------------------------------------------------------------
# Parameter repacking (host-side, once per parameter set).
# ----------------------------------------------------------------------------
def _build_row_conv_mats(wt, width, pad):
    """PyTorch OIHW conv weight (Cout, Cin, K, K) -> banded row-matmul matrices.

    Returns M of shape (K, width*Cin, width*Cout) with
        M[kh, (wo+kw-pad)*Cin + ci, wo*Cout + co] = wt[co, ci, kh, kw]
    Entries whose input column falls outside [0, width) are omitted, which
    implements the zero padding along W inside the matmul itself.
    Packed as bf16 (matmul operand dtype); accumulation stays f32.
    """
    wt = np.asarray(wt, np.float32)
    cout, cin, kk, _ = wt.shape
    m = np.zeros((kk, width * cin, width * cout), np.float32)
    for kh in range(kk):
        for kw in range(kk):
            tap = wt[:, :, kh, kw].T                      # (Cin, Cout)
            for wo in range(width):
                wi = wo + kw - pad
                if 0 <= wi < width:
                    m[kh, wi * cin:(wi + 1) * cin,
                          wo * cout:(wo + 1) * cout] = tap
    return jnp.asarray(m).astype(jnp.bfloat16)


def _build_shortcut_mat(ws, width):
    """1x1 conv weight (Cout, Cin, 1, 1) -> block-diagonal (W*Cin, W*Cout)."""
    ws = np.asarray(ws, np.float32)
    cout, cin = ws.shape[0], ws.shape[1]
    blk = ws.reshape(cout, cin).T                         # (Cin, Cout)
    s = np.zeros((width * cin, width * cout), np.float32)
    for w in range(width):
        s[w * cin:(w + 1) * cin, w * cout:(w + 1) * cout] = blk
    return jnp.asarray(s).astype(jnp.bfloat16)


def _images_per_step(n, h, target_rows=256):
    """Images per grid step: fill the MXU M dim, keep >=2 grid steps, divide n."""
    b = max(1, min(n, target_rows // max(h, 1)))
    while b > 1 and pl.cdiv(n, b) < 2:      # keep megacore (v7x) splittable
        b -= 1
    while n % b:                            # no ragged last block
        b -= 1
    return b


# ----------------------------------------------------------------------------
# Fused D_Block kernel (B images per grid step).
# ----------------------------------------------------------------------------
def _d_block_kernel(x_ref, clip_ref, m1_ref, m2_ref, s_ref, b_ref,
                    gamma_ref, beta_ref, out_ref):
    """Fused conv_r (two 3x3 conv + LeakyReLU) + 1x1 shortcut + combine.

    x_ref    : (B, H, W*Cin)        VMEM   lane-dense pixel rows
    clip_ref : (B, H, W*Cout)       VMEM   CLIP feature, same layout
    m1_ref   : (K, W*Cin,  W*Cout)  VMEM   bf16 banded matrices (conv_r[0])
    m2_ref   : (K, W*Cout, W*Cout)  VMEM   bf16 banded matrices (conv_r[2])
    s_ref    : (W*Cin, W*Cout)      VMEM   bf16 block-diag 1x1 shortcut matrix
    b_ref    : (1, W*Cout)          VMEM   tiled shortcut bias (f32)
    gamma_ref, beta_ref : (1,)      SMEM   scalars
    out_ref  : (B, H, W*Cout)       VMEM
    """
    K = m1_ref.shape[0]
    P = (K - 1) // 2
    B, H, wcin = x_ref.shape
    wcout = out_ref.shape[2]
    rows = B * H

    x2d = x_ref[...].reshape(rows, wcin)                  # (B*H, W*Cin) f32
    # Row index within its image (for halo masking of rolled rows).
    h_idx = jax.lax.broadcasted_iota(jnp.int32, (rows, 1), 0) % H

    def conv_rows(inp_f32, m_ref):
        # Center tap: no shift, no mask; initializes the accumulator directly.
        acc = jnp.dot(inp_f32.astype(jnp.bfloat16), m_ref[P],
                      preferred_element_type=jnp.float32)
        for kh in range(K):                               # static unroll
            if kh == P:
                continue
            # Desired row: inp[r + (kh-P)] if the source row stays inside the
            # same image, else 0 (H-halo zero padding).  roll + mask keeps the
            # shift on the XLU and avoids sublane-misaligned slices.
            shifted = pltpu.roll(inp_f32, shift=(P - kh) % rows, axis=0)
            src_h = h_idx + (kh - P)
            valid = jnp.logical_and(src_h >= 0, src_h < H)
            shifted = jnp.where(valid, shifted, 0.0)
            acc = acc + jnp.dot(shifted.astype(jnp.bfloat16), m_ref[kh],
                                preferred_element_type=jnp.float32)
        return acc

    # ---- conv_r[0] + LeakyReLU ----------------------------------------------
    hidden = _leaky_relu(conv_rows(x2d, m1_ref))          # (B*H, W*Cout) f32

    # ---- conv_r[2] + LeakyReLU ----------------------------------------------
    res = _leaky_relu(conv_rows(hidden, m2_ref))          # (B*H, W*Cout) f32

    # ---- 1x1 learned shortcut (+bias) and gamma/beta/CLIP combine -----------
    shortcut = jnp.dot(x2d.astype(jnp.bfloat16), s_ref[...],
                       preferred_element_type=jnp.float32) + b_ref[...]
    gamma = gamma_ref[0]
    beta = beta_ref[0]
    out = shortcut + gamma * res + beta * clip_ref[...].reshape(rows, wcout)
    out_ref[...] = out.reshape(B, H, wcout).astype(out_ref.dtype)


# ----------------------------------------------------------------------------
# Public wrapper: PyTorch-style NCHW in / NCHW out.
# ----------------------------------------------------------------------------
def d_block_forward(x_nchw, clip_nchw, w1, w2, ws, wsb, gamma, beta,
                    k=3, s=1, p=1):
    """D_Block forward (res=True, CLIP_feat=True, learned_shortcut=True).

    Weights use PyTorch layouts: w1 (fout,fin,k,k), w2 (fout,fout,k,k),
    ws (fout,fin,1,1), wsb (fout,), gamma/beta (1,).
    """
    assert s == 1 and 2 * p == k - 1, "only stride-1 'same' convs implemented"

    n, cin, h, w = x_nchw.shape
    cout = w1.shape[0]
    wcin, wcout = w * cin, w * cout

    # NCHW -> lane-dense pixel rows (N, H, W*C).
    x_rows = jnp.transpose(x_nchw, (0, 2, 3, 1)).reshape(
        n, h, wcin).astype(jnp.float32)
    clip_rows = jnp.transpose(clip_nchw, (0, 2, 3, 1)).reshape(
        n, h, wcout).astype(jnp.float32)

    # One-time parameter repack into banded / block-diagonal bf16 matrices.
    m1 = _build_row_conv_mats(w1, w, p)                   # (k, wcin,  wcout)
    m2 = _build_row_conv_mats(w2, w, p)                   # (k, wcout, wcout)
    s_mat = _build_shortcut_mat(ws, w)                    # (wcin, wcout)
    b_row = jnp.tile(jnp.reshape(wsb, (cout,)).astype(jnp.float32),
                     w).reshape(1, wcout)                 # (1, wcout)
    gamma = jnp.reshape(gamma, (1,)).astype(jnp.float32)
    beta = jnp.reshape(beta, (1,)).astype(jnp.float32)

    # Batch images per grid step so the matmul M dim is B*H.
    bstep = _images_per_step(n, h)
    grid = (n // bstep,)

    # Honest VMEM budget: double-buffered blocks + resident weights + margin.
    block_bytes = bstep * h * (wcin + 2 * wcout) * 4
    weight_bytes = int(m1.nbytes + m2.nbytes + s_mat.nbytes + b_row.nbytes)
    vmem_limit = 2 * (block_bytes + weight_bytes) + (8 << 20)

    # Advisory cost estimate (dense banded matmuls + shortcut).
    flops = 2 * n * h * (k * wcin * wcout + k * wcout * wcout + wcin * wcout)
    bytes_accessed = int(x_rows.nbytes + clip_rows.nbytes + weight_bytes
                         + n * h * wcout * 4)

    out_rows = pl.pallas_call(
        _d_block_kernel,
        out_shape=jax.ShapeDtypeStruct((n, h, wcout), jnp.float32),
        grid=grid,
        in_specs=[
            pl.BlockSpec((bstep, h, wcin), lambda i: (i, 0, 0)),       # x
            pl.BlockSpec((bstep, h, wcout), lambda i: (i, 0, 0)),      # CLIP
            pl.BlockSpec((k, wcin, wcout), lambda i: (0, 0, 0)),       # m1
            pl.BlockSpec((k, wcout, wcout), lambda i: (0, 0, 0)),      # m2
            pl.BlockSpec((wcin, wcout), lambda i: (0, 0)),             # s_mat
            pl.BlockSpec((1, wcout), lambda i: (0, 0)),                # bias
            pl.BlockSpec(memory_space=pltpu.MemorySpace.SMEM),         # gamma
            pl.BlockSpec(memory_space=pltpu.MemorySpace.SMEM),         # beta
        ],
        out_specs=pl.BlockSpec((bstep, h, wcout), lambda i: (i, 0, 0)),
        compiler_params=pltpu.CompilerParams(
            dimension_semantics=("parallel",),          # megacore on v7x
            vmem_limit_bytes=int(vmem_limit),
        ),
        cost_estimate=pl.CostEstimate(
            flops=int(flops), transcendentals=0,
            bytes_accessed=bytes_accessed),
    )(x_rows, clip_rows, m1, m2, s_mat, b_row, gamma, beta)

    # Lane-dense rows -> NCHW at the module boundary (interface contract).
    out = out_rows.reshape(n, h, w, cout)
    return jnp.transpose(out, (0, 3, 1, 2))


# ----------------------------------------------------------------------------
# Pure-JAX reference (mirrors the PyTorch forward, full f32).
# ----------------------------------------------------------------------------
def _reference_forward(x_nchw, clip_nchw, w1, w2, ws, wsb, gamma, beta, p=1):
    dn = ('NCHW', 'OIHW', 'NCHW')

    def conv(inp, wt, pad):
        return jax.lax.conv_general_dilated(
            inp, wt, (1, 1), [(pad, pad), (pad, pad)], dimension_numbers=dn,
            precision=jax.lax.Precision.HIGHEST)

    hid = _leaky_relu(conv(x_nchw, w1, p))
    res = _leaky_relu(conv(hid, w2, p))
    shortcut = conv(x_nchw, ws, 0) + wsb.reshape(1, -1, 1, 1)
    return shortcut + gamma.reshape(()) * res + beta.reshape(()) * clip_nchw


if __name__ == "__main__":
    # D_Block(fin=4, fout=8, k=3, s=1, p=1, res=True, CLIP_feat=True)
    N, FIN, FOUT, H, W, K, P = 2, 4, 8, 16, 16, 3, 1

    key = jax.random.PRNGKey(0)
    k1, k2, k3, k4, k5, k6 = jax.random.split(key, 6)

    x = jax.random.normal(k1, (N, FIN, H, W), jnp.float32)           # NCHW
    clip_feat = jax.random.normal(k2, (N, FOUT, H, W), jnp.float32)  # NCHW

    # PyTorch-layout parameters (synthetic init).
    w1 = 0.1 * jax.random.normal(k3, (FOUT, FIN, K, K), jnp.float32)   # conv_r[0]
    w2 = 0.1 * jax.random.normal(k4, (FOUT, FOUT, K, K), jnp.float32)  # conv_r[2]
    ws = 0.1 * jax.random.normal(k5, (FOUT, FIN, 1, 1), jnp.float32)   # conv_s w
    wsb = 0.1 * jax.random.normal(k6, (FOUT,), jnp.float32)            # conv_s b
    # PyTorch inits gamma/beta to zeros; use nonzero values so the residual
    # and CLIP paths are actually exercised.
    gamma = jnp.array([0.5], jnp.float32)
    beta = jnp.array([0.25], jnp.float32)

    out = d_block_forward(x, clip_feat, w1, w2, ws, wsb, gamma, beta,
                          k=K, s=1, p=P)
    out = jax.block_until_ready(out)
    assert out.shape == (N, FOUT, H, W) and out.dtype == jnp.float32

    ref = jax.block_until_ready(
        _reference_forward(x, clip_feat, w1, w2, ws, wsb, gamma, beta, p=P))
    # Tolerance budget: matmul operands are bf16 (~2^-9 relative per product)
    # with f32 accumulation; sums of <=72 terms over two chained convs give
    # typical errors of a few 1e-3 with tails ~1e-2 at |out| ~ O(1).
    assert jnp.allclose(out, ref, atol=2e-2, rtol=2e-2), (
        f"max abs err = {jnp.max(jnp.abs(out - ref))}")

    print("KERNEL_OK")
</pallas_src>

<mosaic_0001>
module attributes {stable_mosaic.version = 11 : i64} {
  func.func @_d_block_kernel(%arg0: i32, %arg1: memref<1x16x64xf32, #tpu.memory_space<vmem>>, %arg2: memref<1x16x128xf32, #tpu.memory_space<vmem>>, %arg3: memref<3x64x128xbf16, #tpu.memory_space<vmem>>, %arg4: memref<3x128x128xbf16, #tpu.memory_space<vmem>>, %arg5: memref<64x128xbf16, #tpu.memory_space<vmem>>, %arg6: memref<1x128xf32, #tpu.memory_space<vmem>>, %arg7: memref<1xf32, #tpu.memory_space<smem>>, %arg8: memref<1xf32, #tpu.memory_space<smem>>, %arg9: memref<1x16x128xf32, #tpu.memory_space<vmem>>) attributes {dimension_semantics = [#tpu.dimension_semantics<parallel>], iteration_bounds = array<i64: 2>, scalar_prefetch = 0 : i64, scratch_operands = 0 : i64, tpu.core_type = #tpu.core_type<tc>, window_params = [{transform_indices = @transform_0, window_bounds = array<i64: 1, 16, 64>}, {transform_indices = @transform_1, window_bounds = array<i64: 1, 16, 128>}, {pipeline_mode = #tpu.pipeline_mode<synchronous>, transform_indices = @transform_2, window_bounds = array<i64: 3, 64, 128>}, {pipeline_mode = #tpu.pipeline_mode<synchronous>, transform_indices = @transform_3, window_bounds = array<i64: 3, 128, 128>}, {pipeline_mode = #tpu.pipeline_mode<synchronous>, transform_indices = @transform_4, window_bounds = array<i64: 64, 128>}, {pipeline_mode = #tpu.pipeline_mode<synchronous>, transform_indices = @transform_5, window_bounds = array<i64: 1, 128>}, {transform_indices = @transform_6, window_bounds = array<i64: 1>}, {transform_indices = @transform_7, window_bounds = array<i64: 1>}, {transform_indices = @transform_8, window_bounds = array<i64: 1, 16, 128>}]} {
    %c0 = arith.constant 0 : index
    %c0_0 = arith.constant 0 : index
    %c0_1 = arith.constant 0 : index
    %0 = vector.load %arg1[%c0, %c0_0, %c0_1] : memref<1x16x64xf32, #tpu.memory_space<vmem>>, vector<1x16x64xf32>
    %1 = vector.shape_cast %0 : vector<1x16x64xf32> to vector<16x64xf32>
    %2 = tpu.iota {dimensions = array<i32: 0>} : vector<16x1xi32>
    %c16_i32 = arith.constant 16 : i32
    %c0_i32 = arith.constant 0 : i32
    %3 = arith.cmpi eq, %c16_i32, %c0_i32 : i32
    %c1_i32 = arith.constant 1 : i32
    %4 = arith.select %3, %c1_i32, %c16_i32 : i32
    %5 = vector.broadcast %4 : i32 to vector<16x1xi32>
    %6 = arith.remsi %2, %5 : vector<16x1xi32>
    %c0_i32_2 = arith.constant 0 : i32
    %7 = vector.broadcast %c0_i32_2 : i32 to vector<16x1xi32>
    %8 = arith.cmpi ne, %6, %7 : vector<16x1xi32>
    %c0_i32_3 = arith.constant 0 : i32
    %9 = vector.broadcast %c0_i32_3 : i32 to vector<16x1xi32>
    %10 = arith.cmpi slt, %6, %9 : vector<16x1xi32>
    %c0_i32_4 = arith.constant 0 : i32
    %11 = arith.cmpi slt, %4, %c0_i32_4 : i32
    %12 = vector.broadcast %11 : i1 to vector<16x1xi1>
    %13 = vector.broadcast %12 : vector<16x1xi1> to vector<16x1xi1>
    %14 = arith.xori %10, %13 : vector<16x1xi1>
    %15 = arith.andi %14, %8 : vector<16x1xi1>
    %16 = vector.broadcast %4 : i32 to vector<16x1xi32>
    %17 = arith.addi %6, %16 : vector<16x1xi32>
    %18 = arith.select %15, %17, %6 : vector<16x1xi1>, vector<16x1xi32>
    %19 = arith.truncf %1 : vector<16x64xf32> to vector<16x64xbf16>
    %c1 = arith.constant 1 : index
    %c0_5 = arith.constant 0 : index
    %c0_6 = arith.constant 0 : index
    %20 = vector.load %arg3[%c1, %c0_5, %c0_6] : memref<3x64x128xbf16, #tpu.memory_space<vmem>>, vector<1x64x128xbf16>
    %21 = vector.shape_cast %20 : vector<1x64x128xbf16> to vector<64x128xbf16>
    %cst = arith.constant dense<0.000000e+00> : vector<16x128xf32>
    %22 = tpu.matmul %19, %21, %cst {dimension_numbers = #tpu.dot_dimension_numbers<[1], [0], [0], [1], [0, 0, 1, 1], [], []>} : vector<16x64xbf16>, vector<64x128xbf16>, vector<16x128xf32> -> vector<16x128xf32>
    %c1_i32_7 = arith.constant 1 : i32
    %23 = tpu.dynamic_rotate %1 by %c1_i32_7 dim 0 : vector<16x64xf32>, i32 -> vector<16x64xf32>
    %c-1_i32 = arith.constant -1 : i32
    %24 = vector.broadcast %c-1_i32 : i32 to vector<16x1xi32>
    %25 = arith.addi %18, %24 : vector<16x1xi32>
    %c0_i32_8 = arith.constant 0 : i32
    %26 = vector.broadcast %c0_i32_8 : i32 to vector<16x1xi32>
    %27 = arith.cmpi sge, %25, %26 : vector<16x1xi32>
    %c16_i32_9 = arith.constant 16 : i32
    %28 = vector.broadcast %c16_i32_9 : i32 to vector<16x1xi32>
    %29 = arith.cmpi slt, %25, %28 : vector<16x1xi32>
    %30 = arith.andi %27, %29 : vector<16x1xi1>
    %cst_10 = arith.constant 0.000000e+00 : f32
    %31 = vector.shape_cast %30 : vector<16x1xi1> to vector<16x1xi1>
    %32 = vector.broadcast %31 : vector<16x1xi1> to vector<16x64xi1>
    %33 = vector.broadcast %cst_10 : f32 to vector<16x64xf32>
    %34 = arith.select %32, %23, %33 : vector<16x64xi1>, vector<16x64xf32>
    %35 = arith.truncf %34 : vector<16x64xf32> to vector<16x64xbf16>
    %c0_11 = arith.constant 0 : index
    %c0_12 = arith.constant 0 : index
    %c0_13 = arith.constant 0 : index
    %36 = vector.load %arg3[%c0_11, %c0_12, %c0_13] : memref<3x64x128xbf16, #tpu.memory_space<vmem>>, vector<1x64x128xbf16>
    %37 = vector.shape_cast %36 : vector<1x64x128xbf16> to vector<64x128xbf16>
    %cst_14 = arith.constant dense<0.000000e+00> : vector<16x128xf32>
    %38 = tpu.matmul %35, %37, %cst_14 {dimension_numbers = #tpu.dot_dimension_numbers<[1], [0], [0], [1], [0, 0, 1, 1], [], []>} : vector<16x64xbf16>, vector<64x128xbf16>, vector<16x128xf32> -> vector<16x128xf32>
    %39 = arith.addf %22, %38 : vector<16x128xf32>
    %c15_i32 = arith.constant 15 : i32
    %40 = tpu.dynamic_rotate %1 by %c15_i32 dim 0 : vector<16x64xf32>, i32 -> vector<16x64xf32>
    %c1_i32_15 = arith.constant 1 : i32
    %41 = vector.broadcast %c1_i32_15 : i32 to vector<16x1xi32>
    %42 = arith.addi %18, %41 : vector<16x1xi32>
    %c0_i32_16 = arith.constant 0 : i32
    %43 = vector.broadcast %c0_i32_16 : i32 to vector<16x1xi32>
    %44 = arith.cmpi sge, %42, %43 : vector<16x1xi32>
    %c16_i32_17 = arith.constant 16 : i32
    %45 = vector.broadcast %c16_i32_17 : i32 to vector<16x1xi32>
    %46 = arith.cmpi slt, %42, %45 : vector<16x1xi32>
    %47 = arith.andi %44, %46 : vector<16x1xi1>
    %cst_18 = arith.constant 0.000000e+00 : f32
    %48 = vector.shape_cast %47 : vector<16x1xi1> to vector<16x1xi1>
    %49 = vector.broadcast %48 : vector<16x1xi1> to vector<16x64xi1>
    %50 = vector.broadcast %cst_18 : f32 to vector<16x64xf32>
    %51 = arith.select %49, %40, %50 : vector<16x64xi1>, vector<16x64xf32>
    %52 = arith.truncf %51 : vector<16x64xf32> to vector<16x64xbf16>
    %c2 = arith.constant 2 : index
    %c0_19 = arith.constant 0 : index
    %c0_20 = arith.constant 0 : index
    %53 = vector.load %arg3[%c2, %c0_19, %c0_20] : memref<3x64x128xbf16, #tpu.memory_space<vmem>>, vector<1x64x128xbf16>
    %54 = vector.shape_cast %53 : vector<1x64x128xbf16> to vector<64x128xbf16>
    %cst_21 = arith.constant dense<0.000000e+00> : vector<16x128xf32>
    %55 = tpu.matmul %52, %54, %cst_21 {dimension_numbers = #tpu.dot_dimension_numbers<[1], [0], [0], [1], [0, 0, 1, 1], [], []>} : vector<16x64xbf16>, vector<64x128xbf16>, vector<16x128xf32> -> vector<16x128xf32>
    %56 = arith.addf %39, %55 : vector<16x128xf32>
    %cst_22 = arith.constant 0.000000e+00 : f32
    %57 = vector.broadcast %cst_22 : f32 to vector<16x128xf32>
    %58 = arith.cmpf oge, %56, %57 : vector<16x128xf32>
    %cst_23 = arith.constant 2.000000e-01 : f32
    %59 = vector.broadcast %cst_23 : f32 to vector<16x128xf32>
    %60 = arith.mulf %59, %56 : vector<16x128xf32>
    %61 = arith.select %58, %56, %60 : vector<16x128xi1>, vector<16x128xf32>
    %62 = arith.truncf %61 : vector<16x128xf32> to vector<16x128xbf16>
    %c1_24 = arith.constant 1 : index
    %c0_25 = arith.constant 0 : index
    %c0_26 = arith.constant 0 : index
    %63 = vector.load %arg4[%c1_24, %c0_25, %c0_26] : memref<3x128x128xbf16, #tpu.memory_space<vmem>>, vector<1x128x128xbf16>
    %64 = vector.shape_cast %63 : vector<1x128x128xbf16> to vector<128x128xbf16>
    %cst_27 = arith.constant dense<0.000000e+00> : vector<16x128xf32>
    %65 = tpu.matmul %62, %64, %cst_27 {dimension_numbers = #tpu.dot_dimension_numbers<[1], [0], [0], [1], [0, 0, 1, 1], [], []>} : vector<16x128xbf16>, vector<128x128xbf16>, vector<16x128xf32> -> vector<16x128xf32>
    %c1_i32_28 = arith.constant 1 : i32
    %66 = tpu.dynamic_rotate %61 by %c1_i32_28 dim 0 : vector<16x128xf32>, i32 -> vector<16x128xf32>
    %c-1_i32_29 = arith.constant -1 : i32
    %67 = vector.broadcast %c-1_i32_29 : i32 to vector<16x1xi32>
    %68 = arith.addi %18, %67 : vector<16x1xi32>
    %c0_i32_30 = arith.constant 0 : i32
    %69 = vector.broadcast %c0_i32_30 : i32 to vector<16x1xi32>
    %70 = arith.cmpi sge, %68, %69 : vector<16x1xi32>
    %c16_i32_31 = arith.constant 16 : i32
    %71 = vector.broadcast %c16_i32_31 : i32 to vector<16x1xi32>
    %72 = arith.cmpi slt, %68, %71 : vector<16x1xi32>
    %73 = arith.andi %70, %72 : vector<16x1xi1>
    %cst_32 = arith.constant 0.000000e+00 : f32
    %74 = vector.shape_cast %73 : vector<16x1xi1> to vector<16x1xi1>
    %75 = vector.broadcast %74 : vector<16x1xi1> to vector<16x128xi1>
    %76 = vector.broadcast %cst_32 : f32 to vector<16x128xf32>
    %77 = arith.select %75, %66, %76 : vector<16x128xi1>, vector<16x128xf32>
    %78 = arith.truncf %77 : vector<16x128xf32> to vector<16x128xbf16>
    %c0_33 = arith.constant 0 : index
    %c0_34 = arith.constant 0 : index
    %c0_35 = arith.constant 0 : index
    %79 = vector.load %arg4[%c0_33, %c0_34, %c0_35] : memref<3x128x128xbf16, #tpu.memory_space<vmem>>, vector<1x128x128xbf16>
    %80 = vector.shape_cast %79 : vector<1x128x128xbf16> to vector<128x128xbf16>
    %cst_36 = arith.constant dense<0.000000e+00> : vector<16x128xf32>
    %81 = tpu.matmul %78, %80, %cst_36 {dimension_numbers = #tpu.dot_dimension_numbers<[1], [0], [0], [1], [0, 0, 1, 1], [], []>} : vector<16x128xbf16>, vector<128x128xbf16>, vector<16x128xf32> -> vector<16x128xf32>
    %82 = arith.addf %65, %81 : vector<16x128xf32>
    %c15_i32_37 = arith.constant 15 : i32
    %83 = tpu.dynamic_rotate %61 by %c15_i32_37 dim 0 : vector<16x128xf32>, i32 -> vector<16x128xf32>
    %c1_i32_38 = arith.constant 1 : i32
    %84 = vector.broadcast %c1_i32_38 : i32 to vector<16x1xi32>
    %85 = arith.addi %18, %84 : vector<16x1xi32>
    %c0_i32_39 = arith.constant 0 : i32
    %86 = vector.broadcast %c0_i32_39 : i32 to vector<16x1xi32>
    %87 = arith.cmpi sge, %85, %86 : vector<16x1xi32>
    %c16_i32_40 = arith.constant 16 : i32
    %88 = vector.broadcast %c16_i32_40 : i32 to vector<16x1xi32>
    %89 = arith.cmpi slt, %85, %88 : vector<16x1xi32>
    %90 = arith.andi %87, %89 : vector<16x1xi1>
    %cst_41 = arith.constant 0.000000e+00 : f32
    %91 = vector.shape_cast %90 : vector<16x1xi1> to vector<16x1xi1>
    %92 = vector.broadcast %91 : vector<16x1xi1> to vector<16x128xi1>
    %93 = vector.broadcast %cst_41 : f32 to vector<16x128xf32>
    %94 = arith.select %92, %83, %93 : vector<16x128xi1>, vector<16x128xf32>
    %95 = arith.truncf %94 : vector<16x128xf32> to vector<16x128xbf16>
    %c2_42 = arith.constant 2 : index
    %c0_43 = arith.constant 0 : index
    %c0_44 = arith.constant 0 : index
    %96 = vector.load %arg4[%c2_42, %c0_43, %c0_44] : memref<3x128x128xbf16, #tpu.memory_space<vmem>>, vector<1x128x128xbf16>
    %97 = vector.shape_cast %96 : vector<1x128x128xbf16> to vector<128x128xbf16>
    %cst_45 = arith.constant dense<0.000000e+00> : vector<16x128xf32>
    %98 = tpu.matmul %95, %97, %cst_45 {dimension_numbers = #tpu.dot_dimension_numbers<[1], [0], [0], [1], [0, 0, 1, 1], [], []>} : vector<16x128xbf16>, vector<128x128xbf16>, vector<16x128xf32> -> vector<16x128xf32>
    %99 = arith.addf %82, %98 : vector<16x128xf32>
    %cst_46 = arith.constant 0.000000e+00 : f32
    %100 = vector.broadcast %cst_46 : f32 to vector<16x128xf32>
    %101 = arith.cmpf oge, %99, %100 : vector<16x128xf32>
    %cst_47 = arith.constant 2.000000e-01 : f32
    %102 = vector.broadcast %cst_47 : f32 to vector<16x128xf32>
    %103 = arith.mulf %102, %99 : vector<16x128xf32>
    %104 = arith.select %101, %99, %103 : vector<16x128xi1>, vector<16x128xf32>
    %105 = arith.truncf %1 : vector<16x64xf32> to vector<16x64xbf16>
    %c0_48 = arith.constant 0 : index
    %c0_49 = arith.constant 0 : index
    %106 = vector.load %arg5[%c0_48, %c0_49] : memref<64x128xbf16, #tpu.memory_space<vmem>>, vector<64x128xbf16>
    %cst_50 = arith.constant dense<0.000000e+00> : vector<16x128xf32>
    %107 = tpu.matmul %105, %106, %cst_50 {dimension_numbers = #tpu.dot_dimension_numbers<[1], [0], [0], [1], [0, 0, 1, 1], [], []>} : vector<16x64xbf16>, vector<64x128xbf16>, vector<16x128xf32> -> vector<16x128xf32>
    %c0_51 = arith.constant 0 : index
    %c0_52 = arith.constant 0 : index
    %108 = vector.load %arg6[%c0_51, %c0_52] : memref<1x128xf32, #tpu.memory_space<vmem>>, vector<1x128xf32>
    %109 = vector.broadcast %108 : vector<1x128xf32> to vector<16x128xf32>
    %110 = arith.addf %107, %109 : vector<16x128xf32>
    %c0_53 = arith.constant 0 : index
    %111 = memref.load %arg7[%c0_53] : memref<1xf32, #tpu.memory_space<smem>>
    %c0_54 = arith.constant 0 : index
    %112 = memref.load %arg8[%c0_54] : memref<1xf32, #tpu.memory_space<smem>>
    %113 = vector.broadcast %111 : f32 to vector<16x128xf32>
    %114 = arith.mulf %113, %104 : vector<16x128xf32>
    %115 = arith.addf %110, %114 : vector<16x128xf32>
    %c0_55 = arith.constant 0 : index
    %c0_56 = arith.constant 0 : index
    %c0_57 = arith.constant 0 : index
    %116 = vector.load %arg2[%c0_55, %c0_56, %c0_57] : memref<1x16x128xf32, #tpu.memory_space<vmem>>, vector<1x16x128xf32>
    %117 = vector.shape_cast %116 : vector<1x16x128xf32> to vector<16x128xf32>
    %118 = vector.broadcast %112 : f32 to vector<16x128xf32>
    %119 = arith.mulf %118, %117 : vector<16x128xf32>
    %120 = arith.addf %115, %119 : vector<16x128xf32>
    %121 = vector.shape_cast %120 : vector<16x128xf32> to vector<1x16x128xf32>
    %c0_58 = arith.constant 0 : index
    %c0_59 = arith.constant 0 : index
    %c0_60 = arith.constant 0 : index
    %122 = vector.load %arg9[%c0_58, %c0_59, %c0_60] : memref<1x16x128xf32, #tpu.memory_space<vmem>>, vector<1x16x128xf32>
    tpu.vector_store %arg9[%c0_58, %c0_59, %c0_60], %121 {strides = array<i32>} : memref<1x16x128xf32, #tpu.memory_space<vmem>>, vector<1x16x128xf32>,
    return
  }
  func.func @transform_0(%arg0: i32) -> (i32, i32, i32) {
    %c0_i32 = arith.constant 0 : i32
    %c0_i32_0 = arith.constant 0 : i32
    %c0_i32_1 = arith.constant 0 : i32
    return %arg0, %c0_i32, %c0_i32_0 : i32, i32, i32
  }
  func.func @transform_1(%arg0: i32) -> (i32, i32, i32) {
    %c0_i32 = arith.constant 0 : i32
    %c0_i32_0 = arith.constant 0 : i32
    %c0_i32_1 = arith.constant 0 : i32
    return %arg0, %c0_i32, %c0_i32_0 : i32, i32, i32
  }
  func.func @transform_2(%arg0: i32) -> (i32, i32, i32) {
    %c0_i32 = arith.constant 0 : i32
    %c0_i32_0 = arith.constant 0 : i32
    %c0_i32_1 = arith.constant 0 : i32
    %c0_i32_2 = arith.constant 0 : i32
    return %c0_i32, %c0_i32_0, %c0_i32_1 : i32, i32, i32
  }
  func.func @transform_3(%arg0: i32) -> (i32, i32, i32) {
    %c0_i32 = arith.constant 0 : i32
    %c0_i32_0 = arith.constant 0 : i32
    %c0_i32_1 = arith.constant 0 : i32
    %c0_i32_2 = arith.constant 0 : i32
    return %c0_i32, %c0_i32_0, %c0_i32_1 : i32, i32, i32
  }
  func.func @transform_4(%arg0: i32) -> (i32, i32) {
    %c0_i32 = arith.constant 0 : i32
    %c0_i32_0 = arith.constant 0 : i32
    %c0_i32_1 = arith.constant 0 : i32
    return %c0_i32, %c0_i32_0 : i32, i32
  }
  func.func @transform_5(%arg0: i32) -> (i32, i32) {
    %c0_i32 = arith.constant 0 : i32
    %c0_i32_0 = arith.constant 0 : i32
    %c0_i32_1 = arith.constant 0 : i32
    return %c0_i32, %c0_i32_0 : i32, i32
  }
  func.func @transform_6(%arg0: i32) -> i32 {
    %c0_i32 = arith.constant 0 : i32
    %c0_i32_0 = arith.constant 0 : i32
    return %c0_i32 : i32
  }
  func.func @transform_7(%arg0: i32) -> i32 {
    %c0_i32 = arith.constant 0 : i32
    %c0_i32_0 = arith.constant 0 : i32
    return %c0_i32 : i32
  }
  func.func @transform_8(%arg0: i32) -> (i32, i32, i32) {
    %c0_i32 = arith.constant 0 : i32
    %c0_i32_0 = arith.constant 0 : i32
    %c0_i32_1 = arith.constant 0 : i32
    return %arg0, %c0_i32, %c0_i32_0 : i32, i32, i32
  }
}

</mosaic_0001>

<llo_original>
// kernel: tpu_custom_call.1
$region0: #{tpu_custom_call.1}
  #allocation0 [shape = 'u32[]', space=smem, size = 0x4, offset = 0x4, fixed_abs, tag = 'smem constant byte address 0x4 - core index']
  #allocation1 [shape = 'u32[144,128]{1,0:T(1,128)}', space=vmem, size = 0x12000, scoped, tag = 'internal scratch']
  #allocation2 [shape = 'f32[1]{0:T(128)S(6)}', space=smem, size = 0x200, scoped, tag = 'scoped memory for tpu_custom_call.1']
  #allocation3 [shape = 'f32[1]{0:T(128)S(6)}', space=smem, size = 0x200, scoped, tag = 'scoped memory for tpu_custom_call.1']
  %s0 = inlined_call_operand.hbm [shape: f32[2,16,64], index: 0, kind: input, shape index: {}]
  %s1 = inlined_call_operand.hbm [shape: f32[2,16,128], index: 1, kind: input, shape index: {}]
  %s2 = inlined_call_operand.hbm [shape: bf16[3,64,128], index: 2, kind: input, shape index: {}]
  %s3 = inlined_call_operand.hbm [shape: bf16[3,128,128], index: 3, kind: input, shape index: {}]
  %s4 = inlined_call_operand.hbm [shape: bf16[64,128], index: 4, kind: input, shape index: {}]
  %s5 = inlined_call_operand.vmem [shape: f32[1,128], index: 5, kind: input, shape index: {}]
  %s6 = inlined_call_operand.<no memory space> [shape: f32[1], index: 6, kind: input, shape index: {}]
  %s7 = inlined_call_operand.<no memory space> [shape: f32[1], index: 7, kind: input, shape index: {}]
  %s8 = inlined_call_operand.hbm [shape: f32[2,16,128], index: 8, kind: output, shape index: {}]
  %s9 = sld [smem:[#allocation0]]
  $region85: #{tpu_custom_call.1} parent=0
    _
  %s11 = ssub.s32 1, %s9
  %s12 = scalar_select 0, %s11, %s9
  %13 = sst [smem:[#allocation2]] %s6
  %14 = sst [smem:[#allocation3]] %s7
  $region1: #{tpu_custom_call.1} parent=0
    #allocation4 [shape = 'u8[16384]{0}', space=vmem, size = 0x4000, scoped, tag = 'input window, operand 0']
    #allocation5 [shape = 's32[2]{0}', space=sflag, size = 0x8, scoped, tag = 'scoped memory for tpu_custom_call.1']
    #allocation6 [shape = 's32[2]{0}', space=sflag, size = 0x8, scoped, tag = 'scoped memory for tpu_custom_call.1']
    #allocation7 [shape = 'u8[16384]{0}', space=vmem, size = 0x4000, scoped, tag = 'input window, operand 1']
    #allocation8 [shape = 's32[2]{0}', space=sflag, size = 0x8, scoped, tag = 'scoped memory for tpu_custom_call.1']
    #allocation9 [shape = 'u8[49152]{0}', space=vmem, size = 0xc000, scoped, tag = 'input window, operand 2, single buffered']
    #allocation10 [shape = 'u8[98304]{0}', space=vmem, size = 0x18000, scoped, tag = 'input window, operand 3, single buffered']
    #allocation11 [shape = 's32[1]{0}', space=sflag, size = 0x4, scoped, tag = 'scoped memory for tpu_custom_call.1']
    #allocation12 [shape = 'u8[16384]{0}', space=vmem, size = 0x4000, scoped, tag = 'input window, operand 4, single buffered']
    #allocation13 [shape = 'u8[16384]{0}', space=vmem, size = 0x4000, scoped, tag = 'output window, operand 0']
    %15 = vsyncpa [#allocation5], 0
    %s16 = scalar_lea.sflag [#allocation5], 1
    %17 = vsyncpa %s16, 0
    %18 = vsyncpa [#allocation8], 0
    %s19 = scalar_lea.sflag [#allocation8], 1
    %20 = vsyncpa %s19, 0
    %21 = vsyncpa [#allocation11], 0
    %22 = vsyncpa [#allocation6], 0
    %s23 = scalar_lea.sflag [#allocation6], 1
    %24 = vsyncpa %s23, 0
    loop: start=0, step=1, limit=4
    $region2: #{tpu_custom_call.1} parent=1 // loop_pre_header
      _
    $region3: #{tpu_custom_call.1} parent=1 // loop_header
      %s26 = sphi 0, %s30
      %p27 = scmp.ge.s32.totalorder %s26, 4
      %s36 = sphi 0, %s38
      %s39 = sphi 0, %s36
      %s40 = sphi 0, %s39
      %s56 = sphi 0, %s40
      %s62 = sphi 0, %s64
      %s65 = sphi 0, %s62
      %s66 = sphi 0, %s65
      %s82 = sphi 0, %s66
      %s86 = sphi 0, %s86
      %s88 = sphi 0, %s86
      %s89 = sphi 0, %s88
      %s103 = sphi 0, %s89
      %s107 = sphi 0, %s107
      %s109 = sphi 0, %s107
      %s110 = sphi 0, %s109
      %s124 = sphi 0, %s110
      %s128 = sphi 0, %s128
      %s130 = sphi 0, %s128
      %s131 = sphi 0, %s130
      %s145 = sphi 0, %s131
      %s149 = sphi 0, %s149
      %s151 = sphi 0, %s149
      %s152 = sphi 0, %s151
      %s166 = sphi 0, %s152
      %s170 = sphi 0, %s170
      %s172 = sphi 0, %s170
      %s173 = sphi 0, %s172
      %s187 = sphi 0, %s173
      %s191 = sphi 0, %s191
      %s193 = sphi 0, %s191
      %s194 = sphi 0, %s193
      %s208 = sphi 0, %s194
      %s214 = sphi 0, %s216
      %s217 = sphi 0, %s214
      %s218 = sphi 0, %s217
      %s234 = sphi 0, %s218
    $region4: #{tpu_custom_call.1} parent=1 // loop_header_branch
      %29 = sbr.rel (%p27) target = $region8
    $region5: #{tpu_custom_call.1} parent=1 // loop_body
      %s31 = ssub.s32 %s26, 1
      %s32 = ssub.s32 %s26, 2
      %s33 = sadd.s32 %s26, 1
      %s34 = ssub.s32 %s26, %s33
      %p35 = scmp.eq.s32.totalorder %s34, 0
      %s37 = sadd.s32 %s36, 1
      %s38 = scalar_select %p35, %s36, %s37
      %p41 = pneg %p35
      %p42 = scmp.eq.s32.totalorder %s26, 1
      %p43 = por %p41, %p42
      %p44 = scmp.ne.s32.totalorder %s36, %s39
      %p45 = scmp.eq.s32.totalorder %s26, 0
      %p46 = por %p44, %p45
      %p47 = scmp.ne.s32.totalorder %s36, %s39
      %p48 = scmp.eq.s32.totalorder %s31, 1
      %p49 = por %p47, %p48
      %p50 = scmp.ne.s32.totalorder %s39, %s40
      %p51 = scmp.eq.s32.totalorder %s31, 0
      %p52 = por %p50, %p51
      %p53 = scmp.ne.s32.totalorder %s39, %s40
      %p54 = scmp.eq.s32.totalorder %s32, 1
      %p55 = por %p53, %p54
      %p57 = scmp.ne.s32.totalorder %s40, %s56
      %p58 = scmp.eq.s32.totalorder %s32, 0
      %p59 = por %p57, %p58
      %s60 = ssub.s32 %s26, %s33
      %p61 = scmp.eq.s32.totalorder %s60, 0
      %s63 = sadd.s32 %s62, 1
      %s64 = scalar_select %p61, %s62, %s63
      %p67 = pneg %p61
      %p68 = scmp.eq.s32.totalorder %s26, 1
      %p69 = por %p67, %p68
      %p70 = scmp.ne.s32.totalorder %s62, %s65
      %p71 = scmp.eq.s32.totalorder %s26, 0
      %p72 = por %p70, %p71
      %p73 = scmp.ne.s32.totalorder %s62, %s65
      %p74 = scmp.eq.s32.totalorder %s31, 1
      %p75 = por %p73, %p74
      %p76 = scmp.ne.s32.totalorder %s65, %s66
      %p77 = scmp.eq.s32.totalorder %s31, 0
      %p78 = por %p76, %p77
      %p79 = scmp.ne.s32.totalorder %s65, %s66
      %p80 = scmp.eq.s32.totalorder %s32, 1
      %p81 = por %p79, %p80
      %p83 = scmp.ne.s32.totalorder %s66, %s82
      %p84 = scmp.eq.s32.totalorder %s32, 0
      %p85 = por %p83, %p84
      %s87 = sadd.s32 %s86, 1
      %p90 = scmp.eq.s32.totalorder %s26, 1
      %p91 = scmp.ne.s32.totalorder %s86, %s88
      %p92 = scmp.eq.s32.totalorder %s26, 0
      %p93 = por %p91, %p92
      %p94 = scmp.ne.s32.totalorder %s86, %s88
      %p95 = scmp.eq.s32.totalorder %s31, 1
      %p96 = por %p94, %p95
      %p97 = scmp.ne.s32.totalorder %s88, %s89
      %p98 = scmp.eq.s32.totalorder %s31, 0
      %p99 = por %p97, %p98
      %p100 = scmp.ne.s32.totalorder %s88, %s89
      %p101 = scmp.eq.s32.totalorder %s32, 1
      %p102 = por %p100, %p101
      %p104 = scmp.ne.s32.totalorder %s89, %s103
      %p105 = scmp.eq.s32.totalorder %s32, 0
      %p106 = por %p104, %p105
      %s108 = sadd.s32 %s107, 1
      %p111 = scmp.eq.s32.totalorder %s26, 1
      %p112 = scmp.ne.s32.totalorder %s107, %s109
      %p113 = scmp.eq.s32.totalorder %s26, 0
      %p114 = por %p112, %p113
      %p115 = scmp.ne.s32.totalorder %s107, %s109
      %p116 = scmp.eq.s32.totalorder %s31, 1
      %p117 = por %p115, %p116
      %p118 = scmp.ne.s32.totalorder %s109, %s110
      %p119 = scmp.eq.s32.totalorder %s31, 0
      %p120 = por %p118, %p119
      %p121 = scmp.ne.s32.totalorder %s109, %s110
      %p122 = scmp.eq.s32.totalorder %s32, 1
      %p123 = por %p121, %p122
      %p125 = scmp.ne.s32.totalorder %s110, %s124
      %p126 = scmp.eq.s32.totalorder %s32, 0
      %p127 = por %p125, %p126
      %s129 = sadd.s32 %s128, 1
      %p132 = scmp.eq.s32.totalorder %s26, 1
      %p133 = scmp.ne.s32.totalorder %s128, %s130
      %p134 = scmp.eq.s32.totalorder %s26, 0
      %p135 = por %p133, %p134
      %p136 = scmp.ne.s32.totalorder %s128, %s130
      %p137 = scmp.eq.s32.totalorder %s31, 1
      %p138 = por %p136, %p137
      %p139 = scmp.ne.s32.totalorder %s130, %s131
      %p140 = scmp.eq.s32.totalorder %s31, 0
      %p141 = por %p139, %p140
      %p142 = scmp.ne.s32.totalorder %s130, %s131
      %p143 = scmp.eq.s32.totalorder %s32, 1
      %p144 = por %p142, %p143
      %p146 = scmp.ne.s32.totalorder %s131, %s145
      %p147 = scmp.eq.s32.totalorder %s32, 0
      %p148 = por %p146, %p147
      %s150 = sadd.s32 %s149, 1
      %p153 = scmp.eq.s32.totalorder %s26, 1
      %p154 = scmp.ne.s32.totalorder %s149, %s151
      %p155 = scmp.eq.s32.totalorder %s26, 0
      %p156 = por %p154, %p155
      %p157 = scmp.ne.s32.totalorder %s149, %s151
      %p158 = scmp.eq.s32.totalorder %s31, 1
      %p159 = por %p157, %p158
      %p160 = scmp.ne.s32.totalorder %s151, %s152
      %p161 = scmp.eq.s32.totalorder %s31, 0
      %p162 = por %p160, %p161
      %p163 = scmp.ne.s32.totalorder %s151, %s152
      %p164 = scmp.eq.s32.totalorder %s32, 1
      %p165 = por %p163, %p164
      %p167 = scmp.ne.s32.totalorder %s152, %s166
      %p168 = scmp.eq.s32.totalorder %s32, 0
      %p169 = por %p167, %p168
      %s171 = sadd.s32 %s170, 1
      %p174 = scmp.eq.s32.totalorder %s26, 1
      %p175 = scmp.ne.s32.totalorder %s170, %s172
      %p176 = scmp.eq.s32.totalorder %s26, 0
      %p177 = por %p175, %p176
      %p178 = scmp.ne.s32.totalorder %s170, %s172
      %p179 = scmp.eq.s32.totalorder %s31, 1
      %p180 = por %p178, %p179
      %p181 = scmp.ne.s32.totalorder %s172, %s173
      %p182 = scmp.eq.s32.totalorder %s31, 0
      %p183 = por %p181, %p182
      %p184 = scmp.ne.s32.totalorder %s172, %s173
      %p185 = scmp.eq.s32.totalorder %s32, 1
      %p186 = por %p184, %p185
      %p188 = scmp.ne.s32.totalorder %s173, %s187
      %p189 = scmp.eq.s32.totalorder %s32, 0
      %p190 = por %p188, %p189
      %s192 = sadd.s32 %s191, 1
      %p195 = scmp.eq.s32.totalorder %s26, 1
      %p196 = scmp.ne.s32.totalorder %s191, %s193
      %p197 = scmp.eq.s32.totalorder %s26, 0
      %p198 = por %p196, %p197
      %p199 = scmp.ne.s32.totalorder %s191, %s193
      %p200 = scmp.eq.s32.totalorder %s31, 1
      %p201 = por %p199, %p200
      %p202 = scmp.ne.s32.totalorder %s193, %s194
      %p203 = scmp.eq.s32.totalorder %s31, 0
      %p204 = por %p202, %p203
      %p205 = scmp.ne.s32.totalorder %s193, %s194
      %p206 = scmp.eq.s32.totalorder %s32, 1
      %p207 = por %p205, %p206
      %p209 = scmp.ne.s32.totalorder %s194, %s208
      %p210 = scmp.eq.s32.totalorder %s32, 0
      %p211 = por %p209, %p210
      %s212 = ssub.s32 %s26, %s33
      %p213 = scmp.eq.s32.totalorder %s212, 0
      %s215 = sadd.s32 %s214, 1
      %s216 = scalar_select %p213, %s214, %s215
      %p219 = pneg %p213
      %p220 = scmp.eq.s32.totalorder %s26, 1
      %p221 = por %p219, %p220
      %p222 = scmp.ne.s32.totalorder %s214, %s217
      %p223 = scmp.eq.s32.totalorder %s26, 0
      %p224 = por %p222, %p223
      %p225 = scmp.ne.s32.totalorder %s214, %s217
      %p226 = scmp.eq.s32.totalorder %s31, 1
      %p227 = por %p225, %p226
      %p228 = scmp.ne.s32.totalorder %s217, %s218
      %p229 = scmp.eq.s32.totalorder %s31, 0
      %p230 = por %p228, %p229
      %p231 = scmp.ne.s32.totalorder %s217, %s218
      %p232 = scmp.eq.s32.totalorder %s32, 1
      %p233 = por %p231, %p232
      %p235 = scmp.ne.s32.totalorder %s218, %s234
      %p236 = scmp.eq.s32.totalorder %s32, 0
      %p237 = por %p235, %p236
      %p238 = scmp.le.s32.totalorder 1, %s26
      %p239 = scmp.lt.s32.totalorder %s26, 3
      %p240 = pnand %p238, %p239
      %p241 = pneg %p240
      // Predicated region
      $region9: #{tpu_custom_call.1} parent=5 // pred_check
        _
      $region10: #{tpu_custom_call.1} parent=5 // pred_check_branch
        %243 = sbr.rel (%p240) target = $region12
      $region11: #{tpu_custom_call.1} parent=5 // pred_region
        %s244 = ssub.s32 %s26, 1
        // Predicated region
        $region13: #{tpu_custom_call.1} parent=11 // pred_check
          %p245 = pneg %p99
        $region14: #{tpu_custom_call.1} parent=11 // pred_check_branch
          %247 = sbr.rel (%p245) target = $region16
        $region15: #{tpu_custom_call.1} parent=11 // pred_region
          %s249 = ssub.s32 1536, 1536
          %250 = vsyncadd [#allocation8], %s249
          %s251 = sshll.u32 [#allocation9], 4
          %s252 = int_to_ptr.vmem [resolvable:$true] %s251
          %257 = dma.hbm_to_vmem [thread:$0]  %s2, 1536, %s252, [#allocation8], 64, 64, 4
        $region16: #{tpu_custom_call.1} parent=11 // pred_fallthru
          _
        // Predicated region
        $region17: #{tpu_custom_call.1} parent=11 // pred_check
          %p258 = pneg %p120
        $region18: #{tpu_custom_call.1} parent=11 // pred_check_branch
          %260 = sbr.rel (%p258) target = $region20
        $region19: #{tpu_custom_call.1} parent=11 // pred_region
          %s262 = ssub.s32 3072, 3072
          %263 = vsyncadd [#allocation11], %s262
          %s264 = sshll.u32 [#allocation10], 4
          %s265 = int_to_ptr.vmem [resolvable:$true] %s264
          %270 = dma.hbm_to_vmem [thread:$0]  %s3, 3072, %s265, [#allocation11], 64, 64, 4
        $region20: #{tpu_custom_call.1} parent=11 // pred_fallthru
          _
        // Predicated region
        $region21: #{tpu_custom_call.1} parent=11 // pred_check
          %p271 = pneg %p141
        $region22: #{tpu_custom_call.1} parent=11 // pred_check_branch
          %273 = sbr.rel (%p271) target = $region24
        $region23: #{tpu_custom_call.1} parent=11 // pred_region
          %s275 = ssub.s32 512, 512
          %276 = vsyncadd [#allocation11], %s275
          %s277 = sshll.u32 [#allocation12], 4
          %s278 = int_to_ptr.vmem [resolvable:$true] %s277
          %283 = dma.hbm_to_vmem [thread:$0]  %s4, 512, %s278, [#allocation11], 64, 64, 4
        $region24: #{tpu_custom_call.1} parent=11 // pred_fallthru
          _
        // Predicated region
        $region25: #{tpu_custom_call.1} parent=11 // pred_check
          %p284 = pneg %p162
        $region26: #{tpu_custom_call.1} parent=11 // pred_check_branch
          %286 = sbr.rel (%p284) target = $region28
        $region27: #{tpu_custom_call.1} parent=11 // pred_region
          _
        $region28: #{tpu_custom_call.1} parent=11 // pred_fallthru
          _
        // Predicated region
        $region29: #{tpu_custom_call.1} parent=11 // pred_check
          %p287 = pneg %p183
        $region30: #{tpu_custom_call.1} parent=11 // pred_check_branch
          %289 = sbr.rel (%p287) target = $region32
        $region31: #{tpu_custom_call.1} parent=11 // pred_region
          _
        $region32: #{tpu_custom_call.1} parent=11 // pred_fallthru
          _
        // Predicated region
        $region33: #{tpu_custom_call.1} parent=11 // pred_check
          %p290 = pneg %p204
        $region34: #{tpu_custom_call.1} parent=11 // pred_check_branch
          %292 = sbr.rel (%p290) target = $region36
        $region35: #{tpu_custom_call.1} parent=11 // pred_region
          _
        $region36: #{tpu_custom_call.1} parent=11 // pred_fallthru
          _
      $region12: #{tpu_custom_call.1} parent=5 // pred_fallthru
        _
      %p293 = scmp.lt.s32.totalorder %s26, 2
      // Predicated region
      $region37: #{tpu_custom_call.1} parent=5 // pred_check
        %p294 = pneg %p293
      $region38: #{tpu_custom_call.1} parent=5 // pred_check_branch
        %296 = sbr.rel (%p294) target = $region40
      $region39: #{tpu_custom_call.1} parent=5 // pred_region
        // Predicated region
        $region41: #{tpu_custom_call.1} parent=39 // pred_check
          %p297 = pneg %p46
        $region42: #{tpu_custom_call.1} parent=39 // pred_check_branch
          %299 = sbr.rel (%p297) target = $region44
        $region43: #{tpu_custom_call.1} parent=39 // pred_region
          %s300 = sand.u32 %s36, 1
          %s301 = scalar_lea.sflag [#allocation5], %s300
          %s302 = sand.u32 %s36, 1
          %s303 = smul.addr %s302, 16
          %s304 = scalar_lea.vmem [#allocation4], %s303
          %s306 = ssub.s32 256, 256
          %307 = vsyncadd %s301, %s306
          %s308 = smul.addr %s26, 2
          %s309 = smul.addr %s308, 128
          %s310 = scalar_lea.hbm %s0, %s309
          %s311 = sshll.u32 %s304, 4
          %s312 = int_to_ptr.vmem [resolvable:$true] %s311
          %317 = dma.hbm_to_vmem [thread:$0]  %s310, 256, %s312, %s301, 128, 128, 8
        $region44: #{tpu_custom_call.1} parent=39 // pred_fallthru
          _
        // Predicated region
        $region45: #{tpu_custom_call.1} parent=39 // pred_check
          %p318 = pneg %p72
        $region46: #{tpu_custom_call.1} parent=39 // pred_check_branch
          %320 = sbr.rel (%p318) target = $region48
        $region47: #{tpu_custom_call.1} parent=39 // pred_region
          %s321 = sand.u32 %s26, 1
          %s322 = scalar_lea.sflag [#allocation8], %s321
          %s323 = sand.u32 %s62, 1
          %s324 = smul.addr %s323, 16
          %s325 = scalar_lea.vmem [#allocation7], %s324
          %s327 = ssub.s32 256, 256
          %328 = vsyncadd %s322, %s327
          %s329 = smul.addr %s26, 2
          %s330 = smul.addr %s329, 128
          %s331 = scalar_lea.hbm %s1, %s330
          %s332 = sshll.u32 %s325, 4
          %s333 = int_to_ptr.vmem [resolvable:$true] %s332
          %338 = dma.hbm_to_vmem [thread:$0]  %s331, 256, %s333, %s322, 128, 128, 8
        $region48: #{tpu_custom_call.1} parent=39 // pred_fallthru
          _
      $region40: #{tpu_custom_call.1} parent=5 // pred_fallthru
        _
      %p339 = scmp.le.s32.totalorder 1, %s26
      %p340 = scmp.lt.s32.totalorder %s26, 3
      %p341 = pnand %p339, %p340
      %p342 = pneg %p341
      // Predicated region
      $region49: #{tpu_custom_call.1} parent=5 // pred_check
        _
      $region50: #{tpu_custom_call.1} parent=5 // pred_check_branch
        %344 = sbr.rel (%p341) target = $region52
      $region51: #{tpu_custom_call.1} parent=5 // pred_region
        %s345 = ssub.s32 %s26, 1
        %s346 = sand.u32 %s39, 1
        %s347 = scalar_lea.sflag [#allocation5], %s346
        %s348 = sand.u32 %s39, 1
        %s349 = smul.addr %s348, 16
        %s350 = scalar_lea.vmem [#allocation4], %s349
        // Predicated region
        $region53: #{tpu_custom_call.1} parent=51 // pred_check
          %p351 = pneg %p52
        $region54: #{tpu_custom_call.1} parent=51 // pred_check_branch
          %353 = sbr.rel (%p351) target = $region56
        $region55: #{tpu_custom_call.1} parent=51 // pred_region
          %354 = dma.done %s347, 256
        $region56: #{tpu_custom_call.1} parent=51 // pred_fallthru
          _
        %s355 = sand.u32 %s31, 1
        %s356 = scalar_lea.sflag [#allocation8], %s355
        %s357 = sand.u32 %s65, 1
        %s358 = smul.addr %s357, 16
        %s359 = scalar_lea.vmem [#allocation7], %s358
        // Predicated region
        $region57: #{tpu_custom_call.1} parent=51 // pred_check
          %p360 = pneg %p78
        $region58: #{tpu_custom_call.1} parent=51 // pred_check_branch
          %362 = sbr.rel (%p360) target = $region60
        $region59: #{tpu_custom_call.1} parent=51 // pred_region
          %363 = dma.done %s356, 256
        $region60: #{tpu_custom_call.1} parent=51 // pred_fallthru
          _
        // Predicated region
        $region61: #{tpu_custom_call.1} parent=51 // pred_check
          %p364 = pneg %p99
        $region62: #{tpu_custom_call.1} parent=51 // pred_check_branch
          %366 = sbr.rel (%p364) target = $region64
        $region63: #{tpu_custom_call.1} parent=51 // pred_region
          %367 = dma.done [#allocation8], 1536
        $region64: #{tpu_custom_call.1} parent=51 // pred_fallthru
          _
        // Predicated region
        $region65: #{tpu_custom_call.1} parent=51 // pred_check
          %p368 = pneg %p120
        $region66: #{tpu_custom_call.1} parent=51 // pred_check_branch
          %370 = sbr.rel (%p368) target = $region68
        $region67: #{tpu_custom_call.1} parent=51 // pred_region
          %371 = dma.done [#allocation11], 3072
        $region68: #{tpu_custom_call.1} parent=51 // pred_fallthru
          _
        // Predicated region
        $region69: #{tpu_custom_call.1} parent=51 // pred_check
          %p372 = pneg %p141
        $region70: #{tpu_custom_call.1} parent=51 // pred_check_branch
          %374 = sbr.rel (%p372) target = $region72
        $region71: #{tpu_custom_call.1} parent=51 // pred_region
          %375 = dma.done [#allocation11], 512
        $region72: #{tpu_custom_call.1} parent=51 // pred_fallthru
          _
        %s376 = sand.u32 %s39, 1
        %s377 = scalar_lea.sflag [#allocation5], %s376
        %s378 = sand.u32 %s39, 1
        %s379 = smul.addr %s378, 16
        %s380 = scalar_lea.vmem [#allocation4], %s379
        %p381 = pneg %p52
        %p382 = pneg %p49
        %s383 = sand.u32 %s31, 1
        %s384 = scalar_lea.sflag [#allocation8], %s383
        %s385 = sand.u32 %s65, 1
        %s386 = smul.addr %s385, 16
        %s387 = scalar_lea.vmem [#allocation7], %s386
        %p388 = pneg %p78
        %p389 = pneg %p75
        %p390 = pneg %p99
        %p391 = pneg %p96
        %p392 = pneg %p120
        %p393 = pneg %p117
        %p394 = pneg %p141
        %p395 = pneg %p138
        %p396 = pneg %p162
        %p397 = pneg %p159
        %p398 = pneg %p183
        %p399 = pneg %p180
        %p400 = pneg %p204
        %p401 = pneg %p201
        %p402 = pneg %p230
        %p403 = pneg %p227
        %s404 = sand.u32 %s217, 1
        %s405 = scalar_lea.sflag [#allocation6], %s404
        %s406 = sand.u32 %s217, 1
        %s407 = smul.addr %s406, 16
        %s408 = scalar_lea.vmem [#allocation13], %s407
        %v410 = vld [vmem:[%s350] sm:$0xff]
        %v411 = vld [vmem:[%s350 + $0x8] sm:$0xff]
        %v412 = vlaneseq
        %v413 = vshrl.u32 %v412, 7
        %v414 = vadd.s32 %v413, 8
        %vm415 = vcmp.lt.s32.totalorder %v413, 0
        %v416 = vsub.s32 0, %v413
        %v417 = vsel %vm415, %v416, %v413
        %v418 = vshrl.u32 %v417, 4
        %v419 = vand.u32 %v417, 15
        %v420 = vsub.s32 0, %v419
        %v421 = vsel %vm415, %v420, %v419
        %vm422 = vcmp.lt.s32.totalorder %v414, 0
        %v423 = vsub.s32 0, %v414
        %v424 = vsel %vm422, %v423, %v414
        %v425 = vshrl.u32 %v424, 4
        %v426 = vand.u32 %v424, 15
        %v427 = vsub.s32 0, %v426
        %v428 = vsel %vm422, %v427, %v426
        %vm429 = vcmp.ne.s32.totalorder %v421, 0
        %vm430 = vcmp.ne.s32.totalorder %v428, 0
        %vm431 = vcmp.lt.s32.totalorder %v421, 0
        %vm432 = vcmp.lt.s32.totalorder %v428, 0
        %vm433 = vmand %vm431, %vm429
        %vm434 = vmand %vm432, %vm430
        %v435 = vadd.s32 %v421, 16
        %v436 = vadd.s32 %v428, 16
        %v437 = vsel %vm433, %v435, %v421
        %v438 = vsel %vm434, %v436, %v428
        %v439 = vpack.c.bf16 %v411, %v410
        %s440 = scalar_lea.vmem [#allocation9], 32
        %v441 = vld [vmem:[%s440] sm:$0xf]
        %v442 = vld [vmem:[%s440 + $0x4] sm:$0xf]
        %v443 = vld [vmem:[%s440 + $0x8] sm:$0xf]
        %v444 = vld [vmem:[%s440 + $0xc] sm:$0xf]
        %v445 = vld [vmem:[%s440 + $0x10] sm:$0xf]
        %v446 = vld [vmem:[%s440 + $0x14] sm:$0xf]
        %v447 = vld [vmem:[%s440 + $0x18] sm:$0xf]
        %v448 = vld [vmem:[%s440 + $0x1c] sm:$0xf]
        %v449 = vrot.slane %v410, 7
        %v450 = vrot.slane %v411, 7
        %vm451 = vcmp.lt.s32.totalorder %v413, 1
        %v452 = vsel %vm451, %v449, %v450
        %v453 = vsel %vm451, %v450, %v449
        %v454 = vadd.s32 %v437, 4294967295
        %v455 = vadd.s32 %v438, 4294967295
        %vm456 = vcmp.ge.s32.totalorder %v454, 0
        %vm457 = vcmp.ge.s32.totalorder %v455, 0
        %vm458 = vcmp.lt.s32.totalorder %v454, 16
        %vm459 = vcmp.lt.s32.totalorder %v455, 16
        %vm460 = vmand %vm456, %vm458
        %vm461 = vmand %vm457, %vm459
        %v462 = vsel %vm460, 1, 0
        %v463 = vsel %vm461, 1, 0
        %vm464 = vcmp.eq.s32.totalorder %v462, 1
        %vm465 = vcmp.eq.s32.totalorder %v463, 1
        %v466 = vsel %vm464, %v453, 0.0
        %v467 = vsel %vm465, %v452, 0.0
        %v468 = vpack.c.bf16 %v467, %v466
        %v469 = vld [vmem:[#allocation9] sm:$0xf]
        %v470 = vld [vmem:[#allocation9 + $0x4] sm:$0xf]
        %v471 = vld [vmem:[#allocation9 + $0x8] sm:$0xf]
        %v472 = vld [vmem:[#allocation9 + $0xc] sm:$0xf]
        %v473 = vld [vmem:[#allocation9 + $0x10] sm:$0xf]
        %v474 = vld [vmem:[#allocation9 + $0x14] sm:$0xf]
        %v475 = vld [vmem:[#allocation9 + $0x18] sm:$0xf]
        %v476 = vld [vmem:[#allocation9 + $0x1c] sm:$0xf]
        %v485 = vunpack.c.l.b16 %v469
        %v486 = vunpack.c.l.b16 %v470
        %v487 = vunpack.c.l.b16 %v471
        %v488 = vunpack.c.l.b16 %v472
        %v489 = vunpack.c.l.b16 %v473
        %v490 = vunpack.c.l.b16 %v474
        %v491 = vunpack.c.l.b16 %v475
        %v492 = vunpack.c.l.b16 %v476
        %v493 = vpack.c.b16 %v486, %v485
        %v494 = vpack.c.b16 %v488, %v487
        %v495 = vpack.c.b16 %v490, %v489
        %v496 = vpack.c.b16 %v492, %v491
        %vm501 = vcmask 523264
        %v503 = vsel %vm501, %v468, 0
        %505 = vmatprep.subr.bf16.mxu0 0
        %506 = vmatpush1.bf16.msra.mxu0 0
        %507 = vmatprep.subr.bf16.mxu0 0
        %508 = vmatpush1.bf16.msra.mxu0 0
        %509 = vmatprep.subr.bf16.mxu0 0
        %510 = vmatpush1.bf16.msra.mxu0 0
        %511 = vmatprep.subr.bf16.mxu0 0
        %512 = vmatpush1.bf16.msra.mxu0 0
        %513 = vmatprep.subr.bf16.mxu0 0
        %514 = vmatpush1.bf16.msra.mxu0 %v496
        %515 = vmatprep.subr.bf16.mxu0 0
        %516 = vmatpush1.bf16.msra.mxu0 %v495
        %517 = vmatprep.subr.bf16.mxu0 0
        %518 = vmatpush1.bf16.msra.mxu0 %v494
        %519 = vmatprep.subr.bf16.mxu0 0
        %520 = vmatpush1.bf16.msra.mxu0 %v493
        %521 = vmatprep.subr.bf16.mxu0 0
        %522 = vmatpush2.bf16.msra.mxu0 0
        %523 = vmatprep.subr.bf16.mxu0 0
        %524 = vmatpush2.bf16.msra.mxu0 0
        %525 = vmatprep.subr.bf16.mxu0 0
        %526 = vmatpush2.bf16.msra.mxu0 0
        %527 = vmatprep.subr.bf16.mxu0 0
        %528 = vmatpush2.bf16.msra.mxu0 0
        %529 = vmatprep.subr.bf16.mxu0 0
        %530 = vmatpush2.bf16.msra.mxu0 0
        %531 = vmatprep.subr.bf16.mxu0 0
        %532 = vmatpush2.bf16.msra.mxu0 0
        %533 = vmatprep.subr.bf16.mxu0 0
        %534 = vmatpush2.bf16.msra.mxu0 0
        %535 = vmatprep.subr.bf16.mxu0 0
        %536 = vmatpush2.bf16.msra.mxu0 0
        %537 = vmatprep.mubr.bf16.mxu0 0
        %538 = vmatmul.mubr.bf16.gmra.mxu0 %v503
        %v539 = vpop.f32.mrf.mxu0
        %v540 = vadd.f32 0.0, %v539
        %v541 = vpop.f32.mrf.mxu0
        %v542 = vpop.f32.mrf.mxu0
        %v543 = vadd.f32 0.0, %v542
        %v544 = vpop.f32.mrf.mxu0
        %545 = vdwg.mxu0
        %v554 = vunpack.c.l.b16 %v441
        %v555 = vunpack.c.l.b16 %v442
        %v556 = vunpack.c.l.b16 %v443
        %v557 = vunpack.c.l.b16 %v444
        %v558 = vunpack.c.l.b16 %v445
        %v559 = vunpack.c.l.b16 %v446
        %v560 = vunpack.c.l.b16 %v447
        %v561 = vunpack.c.l.b16 %v448
        %v562 = vpack.c.b16 %v555, %v554
        %v563 = vpack.c.b16 %v557, %v556
        %v564 = vpack.c.b16 %v559, %v558
        %v565 = vpack.c.b16 %v561, %v560
        %v571 = vsel %vm501, %v439, 0
        %573 = vmatprep.subr.bf16.mxu0 0
        %574 = vmatpush1.bf16.msra.mxu0 0
        %575 = vmatprep.subr.bf16.mxu0 0
        %576 = vmatpush1.bf16.msra.mxu0 0
        %577 = vmatprep.subr.bf16.mxu0 0
        %578 = vmatpush1.bf16.msra.mxu0 0
        %579 = vmatprep.subr.bf16.mxu0 0
        %580 = vmatpush1.bf16.msra.mxu0 0
        %581 = vmatprep.subr.bf16.mxu0 0
        %582 = vmatpush1.bf16.msra.mxu0 %v565
        %583 = vmatprep.subr.bf16.mxu0 0
        %584 = vmatpush1.bf16.msra.mxu0 %v564
        %585 = vmatprep.subr.bf16.mxu0 0
        %586 = vmatpush1.bf16.msra.mxu0 %v563
        %587 = vmatprep.subr.bf16.mxu0 0
        %588 = vmatpush1.bf16.msra.mxu0 %v562
        %589 = vmatprep.subr.bf16.mxu0 0
        %590 = vmatpush2.bf16.msra.mxu0 0
        %591 = vmatprep.subr.bf16.mxu0 0
        %592 = vmatpush2.bf16.msra.mxu0 0
        %593 = vmatprep.subr.bf16.mxu0 0
        %594 = vmatpush2.bf16.msra.mxu0 0
        %595 = vmatprep.subr.bf16.mxu0 0
        %596 = vmatpush2.bf16.msra.mxu0 0
        %597 = vmatprep.subr.bf16.mxu0 0
        %598 = vmatpush2.bf16.msra.mxu0 0
        %599 = vmatprep.subr.bf16.mxu0 0
        %600 = vmatpush2.bf16.msra.mxu0 0
        %601 = vmatprep.subr.bf16.mxu0 0
        %602 = vmatpush2.bf16.msra.mxu0 0
        %603 = vmatprep.subr.bf16.mxu0 0
        %604 = vmatpush2.bf16.msra.mxu0 0
        %605 = vmatprep.mubr.bf16.mxu0 0
        %606 = vmatmul.mubr.bf16.gmra.mxu0 %v571
        %v607 = vpop.f32.mrf.mxu0
        %v608 = vadd.f32 %v540, %v607
        %v609 = vpop.f32.mrf.mxu0
        %v610 = vpop.f32.mrf.mxu0
        %v611 = vadd.f32 %v543, %v610
        %v612 = vpop.f32.mrf.mxu0
        %613 = vdwg.mxu0
        %v614 = vrot.slane %v410, 1
        %v615 = vrot.slane %v411, 1
        %vm616 = vcmp.lt.s32.totalorder %v413, 7
        %v617 = vsel %vm616, %v614, %v615
        %v618 = vsel %vm616, %v615, %v614
        %v619 = vadd.s32 %v437, 1
        %v620 = vadd.s32 %v438, 1
        %vm621 = vcmp.ge.s32.totalorder %v619, 0
        %vm622 = vcmp.ge.s32.totalorder %v620, 0
        %vm623 = vcmp.lt.s32.totalorder %v619, 16
        %vm624 = vcmp.lt.s32.totalorder %v620, 16
        %vm625 = vmand %vm621, %vm623
        %vm626 = vmand %vm622, %vm624
        %v627 = vsel %vm625, 1, 0
        %v628 = vsel %vm626, 1, 0
        %vm629 = vcmp.eq.s32.totalorder %v627, 1
        %vm630 = vcmp.eq.s32.totalorder %v628, 1
        %v631 = vsel %vm629, %v617, 0.0
        %v632 = vsel %vm630, %v618, 0.0
        %v633 = vpack.c.bf16 %v632, %v631
        %s634 = scalar_lea.vmem [#allocation9], 64
        %v635 = vld [vmem:[%s634] sm:$0xf]
        %v636 = vld [vmem:[%s634 + $0x4] sm:$0xf]
        %v637 = vld [vmem:[%s634 + $0x8] sm:$0xf]
        %v638 = vld [vmem:[%s634 + $0xc] sm:$0xf]
        %v639 = vld [vmem:[%s634 + $0x10] sm:$0xf]
        %v640 = vld [vmem:[%s634 + $0x14] sm:$0xf]
        %v641 = vld [vmem:[%s634 + $0x18] sm:$0xf]
        %v642 = vld [vmem:[%s634 + $0x1c] sm:$0xf]
        %v651 = vunpack.c.l.b16 %v635
        %v652 = vunpack.c.l.b16 %v636
        %v653 = vunpack.c.l.b16 %v637
        %v654 = vunpack.c.l.b16 %v638
        %v655 = vunpack.c.l.b16 %v639
        %v656 = vunpack.c.l.b16 %v640
        %v657 = vunpack.c.l.b16 %v641
        %v658 = vunpack.c.l.b16 %v642
        %v659 = vpack.c.b16 %v652, %v651
        %v660 = vpack.c.b16 %v654, %v653
        %v661 = vpack.c.b16 %v656, %v655
        %v662 = vpack.c.b16 %v658, %v657
        %v668 = vsel %vm501, %v633, 0
        %670 = vmatprep.subr.bf16.mxu0 0
        %671 = vmatpush1.bf16.msra.mxu0 0
        %672 = vmatprep.subr.bf16.mxu0 0
        %673 = vmatpush1.bf16.msra.mxu0 0
        %674 = vmatprep.subr.bf16.mxu0 0
        %675 = vmatpush1.bf16.msra.mxu0 0
        %676 = vmatprep.subr.bf16.mxu0 0
        %677 = vmatpush1.bf16.msra.mxu0 0
        %678 = vmatprep.subr.bf16.mxu0 0
        %679 = vmatpush1.bf16.msra.mxu0 %v662
        %680 = vmatprep.subr.bf16.mxu0 0
        %681 = vmatpush1.bf16.msra.mxu0 %v661
        %682 = vmatprep.subr.bf16.mxu0 0
        %683 = vmatpush1.bf16.msra.mxu0 %v660
        %684 = vmatprep.subr.bf16.mxu0 0
        %685 = vmatpush1.bf16.msra.mxu0 %v659
        %686 = vmatprep.subr.bf16.mxu0 0
        %687 = vmatpush2.bf16.msra.mxu0 0
        %688 = vmatprep.subr.bf16.mxu0 0
        %689 = vmatpush2.bf16.msra.mxu0 0
        %690 = vmatprep.subr.bf16.mxu0 0
        %691 = vmatpush2.bf16.msra.mxu0 0
        %692 = vmatprep.subr.bf16.mxu0 0
        %693 = vmatpush2.bf16.msra.mxu0 0
        %694 = vmatprep.subr.bf16.mxu0 0
        %695 = vmatpush2.bf16.msra.mxu0 0
        %696 = vmatprep.subr.bf16.mxu0 0
        %697 = vmatpush2.bf16.msra.mxu0 0
        %698 = vmatprep.subr.bf16.mxu0 0
        %699 = vmatpush2.bf16.msra.mxu0 0
        %700 = vmatprep.subr.bf16.mxu0 0
        %701 = vmatpush2.bf16.msra.mxu0 0
        %702 = vmatprep.mubr.bf16.mxu0 0
        %703 = vmatmul.mubr.bf16.gmra.mxu0 %v668
        %v704 = vpop.f32.mrf.mxu0
        %v705 = vadd.f32 0.0, %v704
        %v706 = vpop.f32.mrf.mxu0
        %v707 = vpop.f32.mrf.mxu0
        %v708 = vadd.f32 0.0, %v707
        %v709 = vpop.f32.mrf.mxu0
        %710 = vdwg.mxu0
        %v711 = vadd.f32 %v608, %v705
        %v712 = vadd.f32 %v611, %v708
        %vm713 = vcmp.ge.f32.partialorder %v711, 0.0
        %vm714 = vcmp.ge.f32.partialorder %v712, 0.0
        %v715 = vmul.f32 %v711, 0.2
        %v716 = vmul.f32 %v712, 0.2
        %v717 = vsel %vm713, %v711, %v715
        %v718 = vsel %vm714, %v712, %v716
        %v719 = vpack.c.bf16 %v718, %v717
        %s720 = scalar_lea.vmem [#allocation10], 64
        %v721 = vld [vmem:[%s720] sm:$0xf]
        %v722 = vld [vmem:[%s720 + $0x4] sm:$0xf]
        %v723 = vld [vmem:[%s720 + $0x8] sm:$0xf]
        %v724 = vld [vmem:[%s720 + $0xc] sm:$0xf]
        %v725 = vld [vmem:[%s720 + $0x10] sm:$0xf]
        %v726 = vld [vmem:[%s720 + $0x14] sm:$0xf]
        %v727 = vld [vmem:[%s720 + $0x18] sm:$0xf]
        %v728 = vld [vmem:[%s720 + $0x1c] sm:$0xf]
        %v729 = vld [vmem:[%s720 + $0x20] sm:$0xf]
        %v730 = vld [vmem:[%s720 + $0x24] sm:$0xf]
        %v731 = vld [vmem:[%s720 + $0x28] sm:$0xf]
        %v732 = vld [vmem:[%s720 + $0x2c] sm:$0xf]
        %v733 = vld [vmem:[%s720 + $0x30] sm:$0xf]
        %v734 = vld [vmem:[%s720 + $0x34] sm:$0xf]
        %v735 = vld [vmem:[%s720 + $0x38] sm:$0xf]
        %v736 = vld [vmem:[%s720 + $0x3c] sm:$0xf]
        %v737 = vrot.slane %v717, 7
        %v738 = vrot.slane %v718, 7
        %v739 = vsel %vm451, %v737, %v738
        %v740 = vsel %vm451, %v738, %v737
        %v741 = vsel %vm464, %v740, 0.0
        %v742 = vsel %vm465, %v739, 0.0
        %v743 = vpack.c.bf16 %v742, %v741
        %v744 = vld [vmem:[#allocation10] sm:$0xf]
        %v745 = vld [vmem:[#allocation10 + $0x4] sm:$0xf]
        %v746 = vld [vmem:[#allocation10 + $0x8] sm:$0xf]
        %v747 = vld [vmem:[#allocation10 + $0xc] sm:$0xf]
        %v748 = vld [vmem:[#allocation10 + $0x10] sm:$0xf]
        %v749 = vld [vmem:[#allocation10 + $0x14] sm:$0xf]
        %v750 = vld [vmem:[#allocation10 + $0x18] sm:$0xf]
        %v751 = vld [vmem:[#allocation10 + $0x1c] sm:$0xf]
        %v752 = vld [vmem:[#allocation10 + $0x20] sm:$0xf]
        %v753 = vld [vmem:[#allocation10 + $0x24] sm:$0xf]
        %v754 = vld [vmem:[#allocation10 + $0x28] sm:$0xf]
        %v755 = vld [vmem:[#allocation10 + $0x2c] sm:$0xf]
        %v756 = vld [vmem:[#allocation10 + $0x30] sm:$0xf]
        %v757 = vld [vmem:[#allocation10 + $0x34] sm:$0xf]
        %v758 = vld [vmem:[#allocation10 + $0x38] sm:$0xf]
        %v759 = vld [vmem:[#allocation10 + $0x3c] sm:$0xf]
        %v776 = vunpack.c.l.b16 %v744
        %v777 = vunpack.c.l.b16 %v745
        %v778 = vunpack.c.l.b16 %v746
        %v779 = vunpack.c.l.b16 %v747
        %v780 = vunpack.c.l.b16 %v748
        %v781 = vunpack.c.l.b16 %v749
        %v782 = vunpack.c.l.b16 %v750
        %v783 = vunpack.c.l.b16 %v751
        %v784 = vunpack.c.l.b16 %v752
        %v785 = vunpack.c.l.b16 %v753
        %v786 = vunpack.c.l.b16 %v754
        %v787 = vunpack.c.l.b16 %v755
        %v788 = vunpack.c.l.b16 %v756
        %v789 = vunpack.c.l.b16 %v757
        %v790 = vunpack.c.l.b16 %v758
        %v791 = vunpack.c.l.b16 %v759
        %v792 = vpack.c.b16 %v777, %v776
        %v793 = vpack.c.b16 %v779, %v778
        %v794 = vpack.c.b16 %v781, %v780
        %v795 = vpack.c.b16 %v783, %v782
        %v796 = vpack.c.b16 %v785, %v784
        %v797 = vpack.c.b16 %v787, %v786
        %v798 = vpack.c.b16 %v789, %v788
        %v799 = vpack.c.b16 %v791, %v790
        %808 = vmatprep.subr.bf16.mxu0 0
        %809 = vmatpush1.bf16.msra.mxu0 %v799
        %810 = vmatprep.subr.bf16.mxu0 0
        %811 = vmatpush1.bf16.msra.mxu0 %v798
        %812 = vmatprep.subr.bf16.mxu0 0
        %813 = vmatpush1.bf16.msra.mxu0 %v797
        %814 = vmatprep.subr.bf16.mxu0 0
        %815 = vmatpush1.bf16.msra.mxu0 %v796
        %816 = vmatprep.subr.bf16.mxu0 0
        %817 = vmatpush1.bf16.msra.mxu0 %v795
        %818 = vmatprep.subr.bf16.mxu0 0
        %819 = vmatpush1.bf16.msra.mxu0 %v794
        %820 = vmatprep.subr.bf16.mxu0 0
        %821 = vmatpush1.bf16.msra.mxu0 %v793
        %822 = vmatprep.subr.bf16.mxu0 0
        %823 = vmatpush1.bf16.msra.mxu0 %v792
        %824 = vmatprep.subr.bf16.mxu0 0
        %825 = vmatpush2.bf16.msra.mxu0 0
        %826 = vmatprep.subr.bf16.mxu0 0
        %827 = vmatpush2.bf16.msra.mxu0 0
        %828 = vmatprep.subr.bf16.mxu0 0
        %829 = vmatpush2.bf16.msra.mxu0 0
        %830 = vmatprep.subr.bf16.mxu0 0
        %831 = vmatpush2.bf16.msra.mxu0 0
        %832 = vmatprep.subr.bf16.mxu0 0
        %833 = vmatpush2.bf16.msra.mxu0 0
        %834 = vmatprep.subr.bf16.mxu0 0
        %835 = vmatpush2.bf16.msra.mxu0 0
        %836 = vmatprep.subr.bf16.mxu0 0
        %837 = vmatpush2.bf16.msra.mxu0 0
        %838 = vmatprep.subr.bf16.mxu0 0
        %839 = vmatpush2.bf16.msra.mxu0 0
        %840 = vmatprep.mubr.bf16.mxu0 0
        %841 = vmatmul.mubr.bf16.gmra.mxu0 %v743
        %v842 = vpop.f32.mrf.mxu0
        %v843 = vadd.f32 0.0, %v842
        %v844 = vpop.f32.mrf.mxu0
        %v845 = vpop.f32.mrf.mxu0
        %v846 = vadd.f32 0.0, %v845
        %v847 = vpop.f32.mrf.mxu0
        %848 = vdwg.mxu0
        %v865 = vunpack.c.l.b16 %v721
        %v866 = vunpack.c.l.b16 %v722
        %v867 = vunpack.c.l.b16 %v723
        %v868 = vunpack.c.l.b16 %v724
        %v869 = vunpack.c.l.b16 %v725
        %v870 = vunpack.c.l.b16 %v726
        %v871 = vunpack.c.l.b16 %v727
        %v872 = vunpack.c.l.b16 %v728
        %v873 = vunpack.c.l.b16 %v729
        %v874 = vunpack.c.l.b16 %v730
        %v875 = vunpack.c.l.b16 %v731
        %v876 = vunpack.c.l.b16 %v732
        %v877 = vunpack.c.l.b16 %v733
        %v878 = vunpack.c.l.b16 %v734
        %v879 = vunpack.c.l.b16 %v735
        %v880 = vunpack.c.l.b16 %v736
        %v881 = vpack.c.b16 %v866, %v865
        %v882 = vpack.c.b16 %v868, %v867
        %v883 = vpack.c.b16 %v870, %v869
        %v884 = vpack.c.b16 %v872, %v871
        %v885 = vpack.c.b16 %v874, %v873
        %v886 = vpack.c.b16 %v876, %v875
        %v887 = vpack.c.b16 %v878, %v877
        %v888 = vpack.c.b16 %v880, %v879
        %897 = vmatprep.subr.bf16.mxu0 0
        %898 = vmatpush1.bf16.msra.mxu0 %v888
        %899 = vmatprep.subr.bf16.mxu0 0
        %900 = vmatpush1.bf16.msra.mxu0 %v887
        %901 = vmatprep.subr.bf16.mxu0 0
        %902 = vmatpush1.bf16.msra.mxu0 %v886
        %903 = vmatprep.subr.bf16.mxu0 0
        %904 = vmatpush1.bf16.msra.mxu0 %v885
        %905 = vmatprep.subr.bf16.mxu0 0
        %906 = vmatpush1.bf16.msra.mxu0 %v884
        %907 = vmatprep.subr.bf16.mxu0 0
        %908 = vmatpush1.bf16.msra.mxu0 %v883
        %909 = vmatprep.subr.bf16.mxu0 0
        %910 = vmatpush1.bf16.msra.mxu0 %v882
        %911 = vmatprep.subr.bf16.mxu0 0
        %912 = vmatpush1.bf16.msra.mxu0 %v881
        %913 = vmatprep.subr.bf16.mxu0 0
        %914 = vmatpush2.bf16.msra.mxu0 0
        %915 = vmatprep.subr.bf16.mxu0 0
        %916 = vmatpush2.bf16.msra.mxu0 0
        %917 = vmatprep.subr.bf16.mxu0 0
        %918 = vmatpush2.bf16.msra.mxu0 0
        %919 = vmatprep.subr.bf16.mxu0 0
        %920 = vmatpush2.bf16.msra.mxu0 0
        %921 = vmatprep.subr.bf16.mxu0 0
        %922 = vmatpush2.bf16.msra.mxu0 0
        %923 = vmatprep.subr.bf16.mxu0 0
        %924 = vmatpush2.bf16.msra.mxu0 0
        %925 = vmatprep.subr.bf16.mxu0 0
        %926 = vmatpush2.bf16.msra.mxu0 0
        %927 = vmatprep.subr.bf16.mxu0 0
        %928 = vmatpush2.bf16.msra.mxu0 0
        %929 = vmatprep.mubr.bf16.mxu0 0
        %930 = vmatmul.mubr.bf16.gmra.mxu0 %v719
        %v931 = vpop.f32.mrf.mxu0
        %v932 = vadd.f32 %v843, %v931
        %v933 = vpop.f32.mrf.mxu0
        %v934 = vpop.f32.mrf.mxu0
        %v935 = vadd.f32 %v846, %v934
        %v936 = vpop.f32.mrf.mxu0
        %937 = vdwg.mxu0
        %v938 = vrot.slane %v717, 1
        %v939 = vrot.slane %v718, 1
        %v940 = vsel %vm616, %v938, %v939
        %v941 = vsel %vm616, %v939, %v938
        %v942 = vsel %vm629, %v940, 0.0
        %v943 = vsel %vm630, %v941, 0.0
        %v944 = vpack.c.bf16 %v943, %v942
        %s945 = scalar_lea.vmem [#allocation10], 128
        %v946 = vld [vmem:[%s945] sm:$0xf]
        %v947 = vld [vmem:[%s945 + $0x4] sm:$0xf]
        %v948 = vld [vmem:[%s945 + $0x8] sm:$0xf]
        %v949 = vld [vmem:[%s945 + $0xc] sm:$0xf]
        %v950 = vld [vmem:[%s945 + $0x10] sm:$0xf]
        %v951 = vld [vmem:[%s945 + $0x14] sm:$0xf]
        %v952 = vld [vmem:[%s945 + $0x18] sm:$0xf]
        %v953 = vld [vmem:[%s945 + $0x1c] sm:$0xf]
        %v954 = vld [vmem:[%s945 + $0x20] sm:$0xf]
        %v955 = vld [vmem:[%s945 + $0x24] sm:$0xf]
        %v956 = vld [vmem:[%s945 + $0x28] sm:$0xf]
        %v957 = vld [vmem:[%s945 + $0x2c] sm:$0xf]
        %v958 = vld [vmem:[%s945 + $0x30] sm:$0xf]
        %v959 = vld [vmem:[%s945 + $0x34] sm:$0xf]
        %v960 = vld [vmem:[%s945 + $0x38] sm:$0xf]
        %v961 = vld [vmem:[%s945 + $0x3c] sm:$0xf]
        %v978 = vunpack.c.l.b16 %v946
        %v979 = vunpack.c.l.b16 %v947
        %v980 = vunpack.c.l.b16 %v948
        %v981 = vunpack.c.l.b16 %v949
        %v982 = vunpack.c.l.b16 %v950
        %v983 = vunpack.c.l.b16 %v951
        %v984 = vunpack.c.l.b16 %v952
        %v985 = vunpack.c.l.b16 %v953
        %v986 = vunpack.c.l.b16 %v954
        %v987 = vunpack.c.l.b16 %v955
        %v988 = vunpack.c.l.b16 %v956
        %v989 = vunpack.c.l.b16 %v957
        %v990 = vunpack.c.l.b16 %v958
        %v991 = vunpack.c.l.b16 %v959
        %v992 = vunpack.c.l.b16 %v960
        %v993 = vunpack.c.l.b16 %v961
        %v994 = vpack.c.b16 %v979, %v978
        %v995 = vpack.c.b16 %v981, %v980
        %v996 = vpack.c.b16 %v983, %v982
        %v997 = vpack.c.b16 %v985, %v984
        %v998 = vpack.c.b16 %v987, %v986
        %v999 = vpack.c.b16 %v989, %v988
        %v1000 = vpack.c.b16 %v991, %v990
        %v1001 = vpack.c.b16 %v993, %v992
        %1010 = vmatprep.subr.bf16.mxu0 0
        %1011 = vmatpush1.bf16.msra.mxu0 %v1001
        %1012 = vmatprep.subr.bf16.mxu0 0
        %1013 = vmatpush1.bf16.msra.mxu0 %v1000
        %1014 = vmatprep.subr.bf16.mxu0 0
        %1015 = vmatpush1.bf16.msra.mxu0 %v999
        %1016 = vmatprep.subr.bf16.mxu0 0
        %1017 = vmatpush1.bf16.msra.mxu0 %v998
        %1018 = vmatprep.subr.bf16.mxu0 0
        %1019 = vmatpush1.bf16.msra.mxu0 %v997
        %1020 = vmatprep.subr.bf16.mxu0 0
        %1021 = vmatpush1.bf16.msra.mxu0 %v996
        %1022 = vmatprep.subr.bf16.mxu0 0
        %1023 = vmatpush1.bf16.msra.mxu0 %v995
        %1024 = vmatprep.subr.bf16.mxu0 0
        %1025 = vmatpush1.bf16.msra.mxu0 %v994
        %1026 = vmatprep.subr.bf16.mxu0 0
        %1027 = vmatpush2.bf16.msra.mxu0 0
        %1028 = vmatprep.subr.bf16.mxu0 0
        %1029 = vmatpush2.bf16.msra.mxu0 0
        %1030 = vmatprep.subr.bf16.mxu0 0
        %1031 = vmatpush2.bf16.msra.mxu0 0
        %1032 = vmatprep.subr.bf16.mxu0 0
        %1033 = vmatpush2.bf16.msra.mxu0 0
        %1034 = vmatprep.subr.bf16.mxu0 0
        %1035 = vmatpush2.bf16.msra.mxu0 0
        %1036 = vmatprep.subr.bf16.mxu0 0
        %1037 = vmatpush2.bf16.msra.mxu0 0
        %1038 = vmatprep.subr.bf16.mxu0 0
        %1039 = vmatpush2.bf16.msra.mxu0 0
        %1040 = vmatprep.subr.bf16.mxu0 0
        %1041 = vmatpush2.bf16.msra.mxu0 0
        %1042 = vmatprep.mubr.bf16.mxu0 0
        %1043 = vmatmul.mubr.bf16.gmra.mxu0 %v944
        %v1044 = vpop.f32.mrf.mxu0
        %v1045 = vadd.f32 0.0, %v1044
        %v1046 = vpop.f32.mrf.mxu0
        %v1047 = vpop.f32.mrf.mxu0
        %v1048 = vadd.f32 0.0, %v1047
        %v1049 = vpop.f32.mrf.mxu0
        %1050 = vdwg.mxu0
        %v1051 = vadd.f32 %v932, %v1045
        %v1052 = vadd.f32 %v935, %v1048
        %vm1053 = vcmp.ge.f32.partialorder %v1051, 0.0
        %vm1054 = vcmp.ge.f32.partialorder %v1052, 0.0
        %v1055 = vmul.f32 %v1051, 0.2
        %v1056 = vmul.f32 %v1052, 0.2
        %v1057 = vsel %vm1053, %v1051, %v1055
        %v1058 = vsel %vm1054, %v1052, %v1056
        %v1059 = vld [vmem:[#allocation12] sm:$0xf]
        %v1060 = vld [vmem:[#allocation12 + $0x4] sm:$0xf]
        %v1061 = vld [vmem:[#allocation12 + $0x8] sm:$0xf]
        %v1062 = vld [vmem:[#allocation12 + $0xc] sm:$0xf]
        %v1063 = vld [vmem:[#allocation12 + $0x10] sm:$0xf]
        %v1064 = vld [vmem:[#allocation12 + $0x14] sm:$0xf]
        %v1065 = vld [vmem:[#allocation12 + $0x18] sm:$0xf]
        %v1066 = vld [vmem:[#allocation12 + $0x1c] sm:$0xf]
        %v1067 = vld [vmem:[%s5] sm:$0x1]
        %v1069 = vlaneseq
        %v1070 = vshrl.u32 %v1069, 7
        %v1071 = vsub.s32 0, %v1070
        %v1072 = vrot.slane %v1067, %v1071
        %v1082 = vunpack.c.l.b16 %v1059
        %v1083 = vunpack.c.l.b16 %v1060
        %v1084 = vunpack.c.l.b16 %v1061
        %v1085 = vunpack.c.l.b16 %v1062
        %v1086 = vunpack.c.l.b16 %v1063
        %v1087 = vunpack.c.l.b16 %v1064
        %v1088 = vunpack.c.l.b16 %v1065
        %v1089 = vunpack.c.l.b16 %v1066
        %v1090 = vpack.c.b16 %v1083, %v1082
        %v1091 = vpack.c.b16 %v1085, %v1084
        %v1092 = vpack.c.b16 %v1087, %v1086
        %v1093 = vpack.c.b16 %v1089, %v1088
        %1098 = vmatprep.subr.bf16.mxu0 0
        %1099 = vmatpush1.bf16.msra.mxu0 0
        %1100 = vmatprep.subr.bf16.mxu0 0
        %1101 = vmatpush1.bf16.msra.mxu0 0
        %1102 = vmatprep.subr.bf16.mxu0 0
        %1103 = vmatpush1.bf16.msra.mxu0 0
        %1104 = vmatprep.subr.bf16.mxu0 0
        %1105 = vmatpush1.bf16.msra.mxu0 0
        %1106 = vmatprep.subr.bf16.mxu0 0
        %1107 = vmatpush1.bf16.msra.mxu0 %v1093
        %1108 = vmatprep.subr.bf16.mxu0 0
        %1109 = vmatpush1.bf16.msra.mxu0 %v1092
        %1110 = vmatprep.subr.bf16.mxu0 0
        %1111 = vmatpush1.bf16.msra.mxu0 %v1091
        %1112 = vmatprep.subr.bf16.mxu0 0
        %1113 = vmatpush1.bf16.msra.mxu0 %v1090
        %1114 = vmatprep.subr.bf16.mxu0 0
        %1115 = vmatpush2.bf16.msra.mxu0 0
        %1116 = vmatprep.subr.bf16.mxu0 0
        %1117 = vmatpush2.bf16.msra.mxu0 0
        %1118 = vmatprep.subr.bf16.mxu0 0
        %1119 = vmatpush2.bf16.msra.mxu0 0
        %1120 = vmatprep.subr.bf16.mxu0 0
        %1121 = vmatpush2.bf16.msra.mxu0 0
        %1122 = vmatprep.subr.bf16.mxu0 0
        %1123 = vmatpush2.bf16.msra.mxu0 0
        %1124 = vmatprep.subr.bf16.mxu0 0
        %1125 = vmatpush2.bf16.msra.mxu0 0
        %1126 = vmatprep.subr.bf16.mxu0 0
        %1127 = vmatpush2.bf16.msra.mxu0 0
        %1128 = vmatprep.subr.bf16.mxu0 0
        %1129 = vmatpush2.bf16.msra.mxu0 0
        %1130 = vmatprep.mubr.bf16.mxu0 0
        %1131 = vmatmul.mubr.bf16.gmra.mxu0 %v571
        %v1132 = vpop.f32.mrf.mxu0
        %v1133 = vadd.f32 %v1072, %v1132
        %v1134 = vpop.f32.mrf.mxu0
        %v1135 = vpop.f32.mrf.mxu0
        %v1136 = vadd.f32 %v1072, %v1135
        %v1137 = vpop.f32.mrf.mxu0
        %1138 = vdwg.mxu0
        %s1139 = sld [smem:[#allocation2]]
        %s1140 = sld [smem:[#allocation3]]
        %v1141 = vstv %s1139
        %v1142 = vmul.f32 %v1141, %v1057
        %v1143 = vmul.f32 %v1141, %v1058
        %v1144 = vadd.f32 %v1133, %v1142
        %v1145 = vadd.f32 %v1136, %v1143
        %v1146 = vld [vmem:[%s359] sm:$0xff]
        %v1147 = vld [vmem:[%s359 + $0x8] sm:$0xff]
        %v1148 = vstv %s1140
        %v1149 = vmul.f32 %v1148, %v1146
        %v1150 = vmul.f32 %v1148, %v1147
        %v1151 = vadd.f32 %v1144, %v1149
        %v1152 = vadd.f32 %v1145, %v1150
        %1153 = vst [vmem:[%s408] sm:$0xff] %v1151
        %1154 = vst [vmem:[%s408 + $0x8] sm:$0xff] %v1152
        %s1155 = sand.u32 %s217, 1
        %s1156 = scalar_lea.sflag [#allocation6], %s1155
        %s1157 = sand.u32 %s217, 1
        %s1158 = smul.addr %s1157, 16
        %s1159 = scalar_lea.vmem [#allocation13], %s1158
        // Predicated region
        $region73: #{tpu_custom_call.1} parent=51 // pred_check
          %p1160 = pneg %p227
        $region74: #{tpu_custom_call.1} parent=51 // pred_check_branch
          %1162 = sbr.rel (%p1160) target = $region76
        $region75: #{tpu_custom_call.1} parent=51 // pred_region
          %s1164 = ssub.s32 256, 256
          %1165 = vsyncadd %s1156, %s1164
          %s1166 = smul.addr %s31, 2
          %s1167 = smul.addr %s1166, 128
          %s1168 = scalar_lea.hbm %s8, %s1167
          %s1169 = sshll.u32 %s1159, 4
          %s1170 = int_to_ptr.vmem [resolvable:$true] %s1169
          %1175 = dma.vmem_to_hbm [thread:$0]  %s1170, 256, %s1168, %s1156, 128, 128, 8
        $region76: #{tpu_custom_call.1} parent=51 // pred_fallthru
          _
      $region52: #{tpu_custom_call.1} parent=5 // pred_fallthru
        _
      %p1176 = scmp.le.s32.totalorder 2, %s26
      // Predicated region
      $region77: #{tpu_custom_call.1} parent=5 // pred_check
        %p1177 = pneg %p1176
      $region78: #{tpu_custom_call.1} parent=5 // pred_check_branch
        %1179 = sbr.rel (%p1177) target = $region80
      $region79: #{tpu_custom_call.1} parent=5 // pred_region
        %s1180 = ssub.s32 %s26, 2
        // Predicated region
        $region81: #{tpu_custom_call.1} parent=79 // pred_check
          %p1181 = pneg %p233
        $region82: #{tpu_custom_call.1} parent=79 // pred_check_branch
          %1183 = sbr.rel (%p1181) target = $region84
        $region83: #{tpu_custom_call.1} parent=79 // pred_region
          %s1184 = sand.u32 %s218, 1
          %s1185 = scalar_lea.sflag [#allocation6], %s1184
          %s1186 = sand.u32 %s218, 1
          %s1187 = smul.addr %s1186, 16
          %s1188 = scalar_lea.vmem [#allocation13], %s1187
          %1189 = dma.done %s1185, 256
        $region84: #{tpu_custom_call.1} parent=79 // pred_fallthru
          _
      $region80: #{tpu_custom_call.1} parent=5 // pred_fallthru
        _
    $region6: #{tpu_custom_call.1} parent=1 // loop_footer
      %s30 = sadd.s32 1, %s26
    $region7: #{tpu_custom_call.1} parent=1 // loop_footer_branch
      %25 = sbr.rel target = $region3
    $region8: #{tpu_custom_call.1} parent=1 // loop_exit
      _
    %1190 = vsyncpa [#allocation5], 1
    %s1191 = scalar_lea.sflag [#allocation5], 1
    %1192 = vsyncpa %s1191, 1
    %1193 = vsyncpa [#allocation8], 1
    %s1194 = scalar_lea.sflag [#allocation8], 1
    %1195 = vsyncpa %s1194, 1
    %1196 = vsyncpa [#allocation11], 1
    %1197 = vsyncpa [#allocation6], 1
    %s1198 = scalar_lea.sflag [#allocation6], 1
    %1199 = vsyncpa %s1198, 1

</llo_original>
